<compile_context>
chip_gen: v6e
topology: v6e:2x2x1
jax: 0.10.0
libtpu: 0.0.40
codegen_flags: <defaults>
</compile_context>

<pallas_src>
import functools

import jax
import jax.numpy as jnp
import numpy as np
from jax.experimental import pallas as pl
from jax.experimental.pallas import tpu as pltpu


# --------------------------------------------------------------------------
# activations
# --------------------------------------------------------------------------
def _hardswish(x):
    return x * jnp.clip(x + 3.0, 0.0, 6.0) * (1.0 / 6.0)


def _hardsigmoid(x):
    return jnp.clip(x + 3.0, 0.0, 6.0) * (1.0 / 6.0)


def _round_up(v, m):
    return (v + m - 1) // m * m


def _cdiv(a, b):
    return -(-a // b)


# --------------------------------------------------------------------------
# Pallas kernel: one (batch, row-tile) pair per grid step.
# Depthwise conv = k*k shifted multiply-accumulates (VPU),
# pointwise conv / SE fc layers = MXU matmuls on bf16 operands, f32 acc.
# --------------------------------------------------------------------------
def _ds_kernel(x_ref, dww_ref, dwb_ref, pww_ref, pwb_ref, *rest,
               k, stride, th, Wo, use_se):
    if use_se:
        sew1_ref, seb1_ref, sew2_ref, seb2_ref, out_ref = rest
    else:
        (out_ref,) = rest

    C = dww_ref.shape[1]          # lane-padded input channels
    Cout = out_ref.shape[-1]      # lane-padded output channels

    def sl(start, count):
        # static slice helper; plain slice when stride == 1
        if stride == 1:
            return slice(start, start + count)
        return slice(start, start + (count - 1) * stride + 1, stride)

    x = x_ref[0].astype(jnp.float32)                   # (Hin_t, Wp, C)

    # ---- depthwise kxk conv ------------------------------------------------
    # Column (kw) selection applied once per kw (k crops), row (kh) selection
    # is a leading-dim slice (cheap vreg-row pick). f32 accumulate, no zeros
    # init: the first tap seeds the accumulator.
    acc = None
    for kw in range(k):
        slab = x[:, sl(kw, Wo), :]                     # (Hin_t, Wo, C)
        for kh in range(k):
            w = dww_ref[kh * k + kw, :].reshape(1, 1, C)
            tap = slab[sl(kh, th)] * w                 # (th, Wo, C)
            acc = tap if acc is None else acc + tap
    y = _hardswish(acc + dwb_ref[0, :].reshape(1, 1, C))

    y2d = y.reshape(th * Wo, C)                        # Wo kept a multiple of 8

    # ---- optional SE block (wrapper guarantees th == Ho, i.e. full image) ---
    if use_se:
        pooled = jnp.mean(y2d, axis=0, keepdims=True)  # (1, C)
        s = jnp.dot(pooled.astype(jnp.bfloat16), sew1_ref[...],
                    preferred_element_type=jnp.float32) + seb1_ref[0, :].reshape(1, -1)
        s = jnp.maximum(s, 0.0)
        s = jnp.dot(s.astype(jnp.bfloat16), sew2_ref[...],
                    preferred_element_type=jnp.float32) + seb2_ref[0, :].reshape(1, -1)
        y2d = y2d * _hardsigmoid(s)

    # ---- pointwise 1x1 conv: bf16 operands on MXU, f32 accumulation ---------
    out = jnp.dot(y2d.astype(jnp.bfloat16), pww_ref[...],
                  preferred_element_type=jnp.float32) + pwb_ref[0, :].reshape(1, Cout)
    out = _hardswish(out)
    out_ref[0] = out.reshape(th, Wo, Cout).astype(out_ref.dtype)   # lane-dense store


# --------------------------------------------------------------------------
# tile-rows chooser: biggest row tile (multiple of 8) within a VMEM budget
# --------------------------------------------------------------------------
def _choose_tile_rows(Ho, Wp, Wo, Cp, Cop, k, stride, budget_bytes=4 << 20):
    best = min(8, Ho)
    th = 8
    while th <= Ho:
        hin = (th - 1) * stride + k
        in_blk = hin * Wp * Cp * 2              # bf16 input block
        out_blk = th * Wo * Cop * 4             # f32 output block
        temps = hin * Wp * Cp * 4 + 3 * th * Wo * Cp * 4
        if 2 * (in_blk + out_blk) + temps <= budget_bytes:
            best = th
        th += 8
    return best


# --------------------------------------------------------------------------
# wrapper (glue: layout, padding, tiling, pallas_call setup)
# --------------------------------------------------------------------------
def depthwise_separable_forward(x_nchw, params, *, stride, kernel_size, use_se,
                                tile_rows=None):
    x = jnp.transpose(x_nchw, (0, 2, 3, 1))             # NCHW -> NHWC
    B, H, W, C = x.shape
    k = kernel_size
    pad = (k - 1) // 2
    Hp, Wp = H + 2 * pad, W + 2 * pad
    Ho = (Hp - k) // stride + 1
    Wo = (Wp - k) // stride + 1
    Cout = params["pw_w"].shape[1]

    LANE = 128
    Cp = _round_up(C, LANE)
    Cop = _round_up(Cout, LANE)

    # ---- spatial row tiling -------------------------------------------------
    if use_se:
        th = Ho          # SE's global pool needs the whole image in one step
        # TODO(synk): two-pass (pool pass, then apply pass) spatial tiling for
        # SE at large resolutions; single-pass tiling breaks the global mean.
    elif tile_rows is not None:
        th = max(1, min(tile_rows, Ho))
    else:
        th = _choose_tile_rows(Ho, Wp, Wo, Cp, Cop, k, stride)
    T = _cdiv(Ho, th)
    Hin_t = (th - 1) * stride + k
    Hp_need = (T * th - 1) * stride + k

    # ---- operand staging: bf16 storage, lane-padded channels ----------------
    x_pad = jnp.pad(x, ((0, 0), (pad, pad + max(0, Hp_need - Hp)),
                        (pad, pad), (0, Cp - C))).astype(jnp.bfloat16)
    # Pre-split overlapping row tiles (duplicates the halo rows; keeps the
    # BlockSpec windows rectangular / non-overlapping).
    x_tiles = jnp.stack(
        [x_pad[:, t * th * stride: t * th * stride + Hin_t] for t in range(T)],
        axis=1).reshape(B * T, Hin_t, Wp, Cp)

    f32 = jnp.float32
    bf16 = jnp.bfloat16
    # depthwise weights are tiny -> keep f32 (no bf16-row unpack, no precision loss)
    dw_w = jnp.zeros((k * k, Cp), f32).at[:, :C].set(params["dw_w"].reshape(k * k, C))
    dw_b = jnp.zeros((1, Cp), f32).at[:, :C].set(params["dw_b"].reshape(1, C))
    pw_w = jnp.zeros((Cp, Cop), bf16).at[:C, :Cout].set(params["pw_w"].astype(bf16))
    pw_b = jnp.zeros((1, Cop), f32).at[:, :Cout].set(params["pw_b"].reshape(1, Cout))

    inputs = [x_tiles, dw_w, dw_b, pw_w, pw_b]
    in_specs = [
        pl.BlockSpec((1, Hin_t, Wp, Cp), lambda b, t: (b * T + t, 0, 0, 0)),
        pl.BlockSpec((k * k, Cp), lambda b, t: (0, 0)),
        pl.BlockSpec((1, Cp), lambda b, t: (0, 0)),
        pl.BlockSpec((Cp, Cop), lambda b, t: (0, 0)),
        pl.BlockSpec((1, Cop), lambda b, t: (0, 0)),
    ]
    if use_se:
        Cm = params["se_w1"].shape[1]
        Cmp = _round_up(Cm, LANE)
        se_w1 = jnp.zeros((Cp, Cmp), bf16).at[:C, :Cm].set(params["se_w1"].astype(bf16))
        se_b1 = jnp.zeros((1, Cmp), f32).at[:, :Cm].set(params["se_b1"].reshape(1, Cm))
        se_w2 = jnp.zeros((Cmp, Cp), bf16).at[:Cm, :C].set(params["se_w2"].astype(bf16))
        se_b2 = jnp.zeros((1, Cp), f32).at[:, :C].set(params["se_b2"].reshape(1, C))
        inputs += [se_w1, se_b1, se_w2, se_b2]
        in_specs += [
            pl.BlockSpec((Cp, Cmp), lambda b, t: (0, 0)),
            pl.BlockSpec((1, Cmp), lambda b, t: (0, 0)),
            pl.BlockSpec((Cmp, Cp), lambda b, t: (0, 0)),
            pl.BlockSpec((1, Cp), lambda b, t: (0, 0)),
        ]

    kernel = functools.partial(_ds_kernel, k=k, stride=stride, th=th, Wo=Wo,
                               use_se=use_se)
    out_flat = pl.pallas_call(
        kernel,
        out_shape=jax.ShapeDtypeStruct((B * T, th, Wo, Cop), x_nchw.dtype),
        grid=(B, T),
        in_specs=in_specs,
        out_specs=pl.BlockSpec((1, th, Wo, Cop), lambda b, t: (b * T + t, 0, 0, 0)),
        compiler_params=pltpu.CompilerParams(
            dimension_semantics=("parallel", "parallel"),
            vmem_limit_bytes=32 * 1024 * 1024),
    )(*inputs)

    out = out_flat.reshape(B, T * th, Wo, Cop)[:, :Ho, :, :Cout]
    return jnp.transpose(out, (0, 3, 1, 2))              # NHWC -> NCHW


# --------------------------------------------------------------------------
# deterministic parameter init (folds conv+BN of every Rep branch)
# --------------------------------------------------------------------------
def _fold_bn(w, gamma, beta, mean, var, eps=1e-5):
    scale = gamma / jnp.sqrt(var + eps)
    return w * scale, beta - mean * scale


def init_params(key, C_in, C_out, k, stride, use_se):
    it = iter(jax.random.split(key, 32))

    def nrm(shape, scale=0.1):
        return scale * jax.random.normal(next(it), shape, dtype=jnp.float32)

    def bn_params(C):
        return (1.0 + nrm((C,)), nrm((C,)), nrm((C,)), 1.0 + jnp.abs(nrm((C,))))

    eps = 1e-5
    ctr = (k - 1) // 2

    # --- RepConvBNLayer (depthwise): kxk branch + 1x1 branch (+ identity BN) ---
    w_k = nrm((k, k, C_in))
    wk_f, bk_f = _fold_bn(w_k, *bn_params(C_in), eps=eps)
    w_1 = nrm((1, 1, C_in))
    w1_f, b1_f = _fold_bn(w_1, *bn_params(C_in), eps=eps)

    dw_w = wk_f.at[ctr:ctr + 1, ctr:ctr + 1, :].add(w1_f)
    dw_b = bk_f + b1_f
    if stride == 1:
        g, b, m, v = bn_params(C_in)
        scale_id = g / jnp.sqrt(v + eps)
        dw_w = dw_w.at[ctr, ctr, :].add(scale_id)
        dw_b = dw_b + (b - m * scale_id)

    # --- pointwise ConvBNLayer ---
    w_pw = nrm((C_in, C_out))
    g, b, m, v = bn_params(C_out)
    sc = g / jnp.sqrt(v + eps)
    pw_w, pw_b = w_pw * sc, b - m * sc

    params = dict(dw_w=dw_w, dw_b=dw_b, pw_w=pw_w, pw_b=pw_b)
    if use_se:
        Cm = max(1, C_in // 4)
        params.update(se_w1=nrm((C_in, Cm)), se_b1=nrm((Cm,)),
                      se_w2=nrm((Cm, C_in)), se_b2=nrm((C_in,)))
    return params


# --------------------------------------------------------------------------
# pure-JAX reference for validation (f32 end-to-end)
# --------------------------------------------------------------------------
def reference_forward(x_nchw, params, *, stride, kernel_size, use_se):
    x = jnp.transpose(x_nchw, (0, 2, 3, 1))
    k = kernel_size
    pad = (k - 1) // 2
    C = x.shape[-1]
    w = params["dw_w"].reshape(k, k, 1, C)                  # HWIO, depthwise
    y = jax.lax.conv_general_dilated(
        x, w, window_strides=(stride, stride),
        padding=[(pad, pad), (pad, pad)],
        dimension_numbers=("NHWC", "HWIO", "NHWC"),
        feature_group_count=C)
    y = _hardswish(y + params["dw_b"])
    if use_se:
        p = jnp.mean(y, axis=(1, 2), keepdims=True)
        s = jnp.maximum(jnp.einsum("bhwc,cd->bhwd", p, params["se_w1"])
                        + params["se_b1"], 0.0)
        s = jnp.einsum("bhwd,dc->bhwc", s, params["se_w2"]) + params["se_b2"]
        y = y * _hardsigmoid(s)
    out = jnp.einsum("bhwc,cd->bhwd", y, params["pw_w"]) + params["pw_b"]
    out = _hardswish(out)
    return jnp.transpose(out, (0, 3, 1, 2))


# --------------------------------------------------------------------------
if __name__ == "__main__":
    key = jax.random.PRNGKey(0)
    kx, kp1, kp2, kp3 = jax.random.split(key, 4)

    B, C_in, H, W = 2, 32, 16, 16
    C_out = 64
    x = jax.random.normal(kx, (B, C_in, H, W), dtype=jnp.float32)

    configs = [
        dict(stride=1, kernel_size=3, use_se=False, tile_rows=8, pkey=kp1),
        dict(stride=1, kernel_size=3, use_se=True, tile_rows=None, pkey=kp2),
        dict(stride=1, kernel_size=5, use_se=False, tile_rows=8, pkey=kp3),
    ]
    for cfg in configs:
        params = init_params(cfg["pkey"], C_in, C_out,
                             cfg["kernel_size"], cfg["stride"], cfg["use_se"])
        out = depthwise_separable_forward(
            x, params, stride=cfg["stride"], kernel_size=cfg["kernel_size"],
            use_se=cfg["use_se"], tile_rows=cfg["tile_rows"])
        out = jax.block_until_ready(out)
        ref = reference_forward(
            x, params, stride=cfg["stride"], kernel_size=cfg["kernel_size"],
            use_se=cfg["use_se"])
        assert out.shape == (B, C_out, H // cfg["stride"], W // cfg["stride"])
        # bf16 operand storage / bf16 MXU feeds vs. f32 reference -> bf16-level
        # tolerance (observed error is ~1e-3; 2e-2 leaves a 10x margin).
        np.testing.assert_allclose(np.asarray(out), np.asarray(ref),
                                   atol=2e-2, rtol=2e-2)

    print("KERNEL_OK")
</pallas_src>

<mosaic_0001>
module attributes {stable_mosaic.version = 11 : i64} {
  func.func @_ds_kernel(%arg0: i32, %arg1: i32, %arg2: memref<1x10x18x128xbf16, #tpu.memory_space<vmem>>, %arg3: memref<9x128xf32, #tpu.memory_space<vmem>>, %arg4: memref<1x128xf32, #tpu.memory_space<vmem>>, %arg5: memref<128x128xbf16, #tpu.memory_space<vmem>>, %arg6: memref<1x128xf32, #tpu.memory_space<vmem>>, %arg7: memref<1x8x16x128xf32, #tpu.memory_space<vmem>>) attributes {dimension_semantics = [#tpu.dimension_semantics<parallel>, #tpu.dimension_semantics<parallel>], iteration_bounds = array<i64: 2, 2>, scalar_prefetch = 0 : i64, scratch_operands = 0 : i64, tpu.core_type = #tpu.core_type<tc>, window_params = [{transform_indices = @transform_0, window_bounds = array<i64: 1, 10, 18, 128>}, {pipeline_mode = #tpu.pipeline_mode<synchronous>, transform_indices = @transform_1, window_bounds = array<i64: 9, 128>}, {pipeline_mode = #tpu.pipeline_mode<synchronous>, transform_indices = @transform_2, window_bounds = array<i64: 1, 128>}, {pipeline_mode = #tpu.pipeline_mode<synchronous>, transform_indices = @transform_3, window_bounds = array<i64: 128, 128>}, {pipeline_mode = #tpu.pipeline_mode<synchronous>, transform_indices = @transform_4, window_bounds = array<i64: 1, 128>}, {transform_indices = @transform_5, window_bounds = array<i64: 1, 8, 16, 128>}]} {
    %c0 = arith.constant 0 : index
    %c0_0 = arith.constant 0 : index
    %c0_1 = arith.constant 0 : index
    %c0_2 = arith.constant 0 : index
    %0 = vector.load %arg2[%c0, %c0_0, %c0_1, %c0_2] : memref<1x10x18x128xbf16, #tpu.memory_space<vmem>>, vector<1x10x18x128xbf16>
    %1 = vector.shape_cast %0 : vector<1x10x18x128xbf16> to vector<10x18x128xbf16>
    %2 = arith.extf %1 : vector<10x18x128xbf16> to vector<10x18x128xf32>
    %3 = vector.extract_strided_slice %2 {offsets = [0, 0, 0], sizes = [10, 16, 128], strides = [1, 1, 1]} : vector<10x18x128xf32> to vector<10x16x128xf32>
    %c0_3 = arith.constant 0 : index
    %c0_4 = arith.constant 0 : index
    %4 = vector.load %arg3[%c0_3, %c0_4] : memref<9x128xf32, #tpu.memory_space<vmem>>, vector<1x128xf32>
    %5 = vector.shape_cast %4 : vector<1x128xf32> to vector<128xf32>
    %6 = vector.shape_cast %5 : vector<128xf32> to vector<1x1x128xf32>
    %7 = vector.extract_strided_slice %3 {offsets = [0, 0, 0], sizes = [8, 16, 128], strides = [1, 1, 1]} : vector<10x16x128xf32> to vector<8x16x128xf32>
    %8 = vector.broadcast %6 : vector<1x1x128xf32> to vector<8x16x128xf32>
    %9 = arith.mulf %7, %8 : vector<8x16x128xf32>
    %c3 = arith.constant 3 : index
    %c0_5 = arith.constant 0 : index
    %10 = vector.load %arg3[%c3, %c0_5] : memref<9x128xf32, #tpu.memory_space<vmem>>, vector<1x128xf32>
    %11 = vector.shape_cast %10 : vector<1x128xf32> to vector<128xf32>
    %12 = vector.shape_cast %11 : vector<128xf32> to vector<1x1x128xf32>
    %13 = vector.extract_strided_slice %3 {offsets = [1, 0, 0], sizes = [8, 16, 128], strides = [1, 1, 1]} : vector<10x16x128xf32> to vector<8x16x128xf32>
    %14 = vector.broadcast %12 : vector<1x1x128xf32> to vector<8x16x128xf32>
    %15 = arith.mulf %13, %14 : vector<8x16x128xf32>
    %16 = arith.addf %9, %15 : vector<8x16x128xf32>
    %c6 = arith.constant 6 : index
    %c0_6 = arith.constant 0 : index
    %17 = vector.load %arg3[%c6, %c0_6] : memref<9x128xf32, #tpu.memory_space<vmem>>, vector<1x128xf32>
    %18 = vector.shape_cast %17 : vector<1x128xf32> to vector<128xf32>
    %19 = vector.shape_cast %18 : vector<128xf32> to vector<1x1x128xf32>
    %20 = vector.extract_strided_slice %3 {offsets = [2, 0, 0], sizes = [8, 16, 128], strides = [1, 1, 1]} : vector<10x16x128xf32> to vector<8x16x128xf32>
    %21 = vector.broadcast %19 : vector<1x1x128xf32> to vector<8x16x128xf32>
    %22 = arith.mulf %20, %21 : vector<8x16x128xf32>
    %23 = arith.addf %16, %22 : vector<8x16x128xf32>
    %24 = vector.extract_strided_slice %2 {offsets = [0, 1, 0], sizes = [10, 16, 128], strides = [1, 1, 1]} : vector<10x18x128xf32> to vector<10x16x128xf32>
    %c1 = arith.constant 1 : index
    %c0_7 = arith.constant 0 : index
    %25 = vector.load %arg3[%c1, %c0_7] : memref<9x128xf32, #tpu.memory_space<vmem>>, vector<1x128xf32>
    %26 = vector.shape_cast %25 : vector<1x128xf32> to vector<128xf32>
    %27 = vector.shape_cast %26 : vector<128xf32> to vector<1x1x128xf32>
    %28 = vector.extract_strided_slice %24 {offsets = [0, 0, 0], sizes = [8, 16, 128], strides = [1, 1, 1]} : vector<10x16x128xf32> to vector<8x16x128xf32>
    %29 = vector.broadcast %27 : vector<1x1x128xf32> to vector<8x16x128xf32>
    %30 = arith.mulf %28, %29 : vector<8x16x128xf32>
    %31 = arith.addf %23, %30 : vector<8x16x128xf32>
    %c4 = arith.constant 4 : index
    %c0_8 = arith.constant 0 : index
    %32 = vector.load %arg3[%c4, %c0_8] : memref<9x128xf32, #tpu.memory_space<vmem>>, vector<1x128xf32>
    %33 = vector.shape_cast %32 : vector<1x128xf32> to vector<128xf32>
    %34 = vector.shape_cast %33 : vector<128xf32> to vector<1x1x128xf32>
    %35 = vector.extract_strided_slice %24 {offsets = [1, 0, 0], sizes = [8, 16, 128], strides = [1, 1, 1]} : vector<10x16x128xf32> to vector<8x16x128xf32>
    %36 = vector.broadcast %34 : vector<1x1x128xf32> to vector<8x16x128xf32>
    %37 = arith.mulf %35, %36 : vector<8x16x128xf32>
    %38 = arith.addf %31, %37 : vector<8x16x128xf32>
    %c7 = arith.constant 7 : index
    %c0_9 = arith.constant 0 : index
    %39 = vector.load %arg3[%c7, %c0_9] : memref<9x128xf32, #tpu.memory_space<vmem>>, vector<1x128xf32>
    %40 = vector.shape_cast %39 : vector<1x128xf32> to vector<128xf32>
    %41 = vector.shape_cast %40 : vector<128xf32> to vector<1x1x128xf32>
    %42 = vector.extract_strided_slice %24 {offsets = [2, 0, 0], sizes = [8, 16, 128], strides = [1, 1, 1]} : vector<10x16x128xf32> to vector<8x16x128xf32>
    %43 = vector.broadcast %41 : vector<1x1x128xf32> to vector<8x16x128xf32>
    %44 = arith.mulf %42, %43 : vector<8x16x128xf32>
    %45 = arith.addf %38, %44 : vector<8x16x128xf32>
    %46 = vector.extract_strided_slice %2 {offsets = [0, 2, 0], sizes = [10, 16, 128], strides = [1, 1, 1]} : vector<10x18x128xf32> to vector<10x16x128xf32>
    %c2 = arith.constant 2 : index
    %c0_10 = arith.constant 0 : index
    %47 = vector.load %arg3[%c2, %c0_10] : memref<9x128xf32, #tpu.memory_space<vmem>>, vector<1x128xf32>
    %48 = vector.shape_cast %47 : vector<1x128xf32> to vector<128xf32>
    %49 = vector.shape_cast %48 : vector<128xf32> to vector<1x1x128xf32>
    %50 = vector.extract_strided_slice %46 {offsets = [0, 0, 0], sizes = [8, 16, 128], strides = [1, 1, 1]} : vector<10x16x128xf32> to vector<8x16x128xf32>
    %51 = vector.broadcast %49 : vector<1x1x128xf32> to vector<8x16x128xf32>
    %52 = arith.mulf %50, %51 : vector<8x16x128xf32>
    %53 = arith.addf %45, %52 : vector<8x16x128xf32>
    %c5 = arith.constant 5 : index
    %c0_11 = arith.constant 0 : index
    %54 = vector.load %arg3[%c5, %c0_11] : memref<9x128xf32, #tpu.memory_space<vmem>>, vector<1x128xf32>
    %55 = vector.shape_cast %54 : vector<1x128xf32> to vector<128xf32>
    %56 = vector.shape_cast %55 : vector<128xf32> to vector<1x1x128xf32>
    %57 = vector.extract_strided_slice %46 {offsets = [1, 0, 0], sizes = [8, 16, 128], strides = [1, 1, 1]} : vector<10x16x128xf32> to vector<8x16x128xf32>
    %58 = vector.broadcast %56 : vector<1x1x128xf32> to vector<8x16x128xf32>
    %59 = arith.mulf %57, %58 : vector<8x16x128xf32>
    %60 = arith.addf %53, %59 : vector<8x16x128xf32>
    %c8 = arith.constant 8 : index
    %c0_12 = arith.constant 0 : index
    %61 = vector.load %arg3[%c8, %c0_12] : memref<9x128xf32, #tpu.memory_space<vmem>>, vector<1x128xf32>
    %62 = vector.shape_cast %61 : vector<1x128xf32> to vector<128xf32>
    %63 = vector.shape_cast %62 : vector<128xf32> to vector<1x1x128xf32>
    %64 = vector.extract_strided_slice %46 {offsets = [2, 0, 0], sizes = [8, 16, 128], strides = [1, 1, 1]} : vector<10x16x128xf32> to vector<8x16x128xf32>
    %65 = vector.broadcast %63 : vector<1x1x128xf32> to vector<8x16x128xf32>
    %66 = arith.mulf %64, %65 : vector<8x16x128xf32>
    %67 = arith.addf %60, %66 : vector<8x16x128xf32>
    %c0_13 = arith.constant 0 : index
    %c0_14 = arith.constant 0 : index
    %68 = vector.load %arg4[%c0_13, %c0_14] : memref<1x128xf32, #tpu.memory_space<vmem>>, vector<1x128xf32>
    %69 = vector.shape_cast %68 : vector<1x128xf32> to vector<128xf32>
    %70 = vector.shape_cast %69 : vector<128xf32> to vector<1x1x128xf32>
    %71 = vector.broadcast %70 : vector<1x1x128xf32> to vector<8x16x128xf32>
    %72 = arith.addf %67, %71 : vector<8x16x128xf32>
    %cst = arith.constant 3.000000e+00 : f32
    %73 = vector.broadcast %cst : f32 to vector<8x16x128xf32>
    %74 = arith.addf %72, %73 : vector<8x16x128xf32>
    %cst_15 = arith.constant 0.000000e+00 : f32
    %cst_16 = arith.constant 6.000000e+00 : f32
    %75 = vector.broadcast %cst_15 : f32 to vector<8x16x128xf32>
    %76 = arith.maximumf %75, %74 : vector<8x16x128xf32>
    %77 = vector.broadcast %cst_16 : f32 to vector<8x16x128xf32>
    %78 = arith.minimumf %77, %76 : vector<8x16x128xf32>
    %79 = arith.mulf %72, %78 : vector<8x16x128xf32>
    %cst_17 = arith.constant 0.166666672 : f32
    %80 = vector.broadcast %cst_17 : f32 to vector<8x16x128xf32>
    %81 = arith.mulf %79, %80 : vector<8x16x128xf32>
    %82 = vector.shape_cast %81 : vector<8x16x128xf32> to vector<128x128xf32>
    %83 = arith.truncf %82 : vector<128x128xf32> to vector<128x128xbf16>
    %c0_18 = arith.constant 0 : index
    %c0_19 = arith.constant 0 : index
    %84 = vector.load %arg5[%c0_18, %c0_19] : memref<128x128xbf16, #tpu.memory_space<vmem>>, vector<128x128xbf16>
    %cst_20 = arith.constant dense<0.000000e+00> : vector<128x128xf32>
    %85 = tpu.matmul %83, %84, %cst_20 {dimension_numbers = #tpu.dot_dimension_numbers<[1], [0], [0], [1], [0, 0, 1, 1], [], []>} : vector<128x128xbf16>, vector<128x128xbf16>, vector<128x128xf32> -> vector<128x128xf32>
    %c0_21 = arith.constant 0 : index
    %c0_22 = arith.constant 0 : index
    %86 = vector.load %arg6[%c0_21, %c0_22] : memref<1x128xf32, #tpu.memory_space<vmem>>, vector<1x128xf32>
    %87 = vector.shape_cast %86 : vector<1x128xf32> to vector<128xf32>
    %88 = vector.shape_cast %87 : vector<128xf32> to vector<1x128xf32>
    %89 = vector.broadcast %88 : vector<1x128xf32> to vector<128x128xf32>
    %90 = arith.addf %85, %89 : vector<128x128xf32>
    %cst_23 = arith.constant 3.000000e+00 : f32
    %91 = vector.broadcast %cst_23 : f32 to vector<128x128xf32>
    %92 = arith.addf %90, %91 : vector<128x128xf32>
    %cst_24 = arith.constant 0.000000e+00 : f32
    %cst_25 = arith.constant 6.000000e+00 : f32
    %93 = vector.broadcast %cst_24 : f32 to vector<128x128xf32>
    %94 = arith.maximumf %93, %92 : vector<128x128xf32>
    %95 = vector.broadcast %cst_25 : f32 to vector<128x128xf32>
    %96 = arith.minimumf %95, %94 : vector<128x128xf32>
    %97 = arith.mulf %90, %96 : vector<128x128xf32>
    %cst_26 = arith.constant 0.166666672 : f32
    %98 = vector.broadcast %cst_26 : f32 to vector<128x128xf32>
    %99 = arith.mulf %97, %98 : vector<128x128xf32>
    %100 = vector.shape_cast %99 : vector<128x128xf32> to vector<8x16x128xf32>
    %c0_27 = arith.constant 0 : index
    %c0_28 = arith.constant 0 : index
    %c0_29 = arith.constant 0 : index
    %c0_30 = arith.constant 0 : index
    %101 = vector.load %arg7[%c0_27, %c0_28, %c0_29, %c0_30] : memref<1x8x16x128xf32, #tpu.memory_space<vmem>>, vector<1x8x16x128xf32>
    %102 = vector.shape_cast %101 : vector<1x8x16x128xf32> to vector<8x16x128xf32>
    %103 = vector.shape_cast %100 : vector<8x16x128xf32> to vector<1x8x16x128xf32>
    tpu.vector_store %arg7[%c0_27, %c0_28, %c0_29, %c0_30], %103 {strides = array<i32>} : memref<1x8x16x128xf32, #tpu.memory_space<vmem>>, vector<1x8x16x128xf32>,
    return
  }
  func.func @transform_0(%arg0: i32, %arg1: i32) -> (i32, i32, i32, i32) {
    %c2_i32 = arith.constant 2 : i32
    %0 = arith.muli %arg0, %c2_i32 : i32
    %1 = arith.addi %0, %arg1 : i32
    %c0_i32 = arith.constant 0 : i32
    %c0_i32_0 = arith.constant 0 : i32
    %c0_i32_1 = arith.constant 0 : i32
    %c0_i32_2 = arith.constant 0 : i32
    return %1, %c0_i32, %c0_i32_0, %c0_i32_1 : i32, i32, i32, i32
  }
  func.func @transform_1(%arg0: i32, %arg1: i32) -> (i32, i32) {
    %c0_i32 = arith.constant 0 : i32
    %c0_i32_0 = arith.constant 0 : i32
    %c0_i32_1 = arith.constant 0 : i32
    return %c0_i32, %c0_i32_0 : i32, i32
  }
  func.func @transform_2(%arg0: i32, %arg1: i32) -> (i32, i32) {
    %c0_i32 = arith.constant 0 : i32
    %c0_i32_0 = arith.constant 0 : i32
    %c0_i32_1 = arith.constant 0 : i32
    return %c0_i32, %c0_i32_0 : i32, i32
  }
  func.func @transform_3(%arg0: i32, %arg1: i32) -> (i32, i32) {
    %c0_i32 = arith.constant 0 : i32
    %c0_i32_0 = arith.constant 0 : i32
    %c0_i32_1 = arith.constant 0 : i32
    return %c0_i32, %c0_i32_0 : i32, i32
  }
  func.func @transform_4(%arg0: i32, %arg1: i32) -> (i32, i32) {
    %c0_i32 = arith.constant 0 : i32
    %c0_i32_0 = arith.constant 0 : i32
    %c0_i32_1 = arith.constant 0 : i32
    return %c0_i32, %c0_i32_0 : i32, i32
  }
  func.func @transform_5(%arg0: i32, %arg1: i32) -> (i32, i32, i32, i32) {
    %c2_i32 = arith.constant 2 : i32
    %0 = arith.muli %arg0, %c2_i32 : i32
    %1 = arith.addi %0, %arg1 : i32
    %c0_i32 = arith.constant 0 : i32
    %c0_i32_0 = arith.constant 0 : i32
    %c0_i32_1 = arith.constant 0 : i32
    %c0_i32_2 = arith.constant 0 : i32
    return %1, %c0_i32, %c0_i32_0, %c0_i32_1 : i32, i32, i32, i32
  }
}

</mosaic_0001>

<llo_original>
// kernel: tpu_custom_call.1
$region0: #{tpu_custom_call.1}
  #allocation0 [shape = 'u32[]', space=smem, size = 0x4, offset = 0x4, fixed_abs, tag = 'smem constant byte address 0x4 - core index']
  #allocation1 [shape = 'u32[144,128]{1,0:T(1,128)}', space=vmem, size = 0x12000, scoped, tag = 'internal scratch']
  %s0 = inlined_call_operand.vmem [shape: bf16[4,10,18,128], index: 0, kind: input, shape index: {}]
  %s1 = inlined_call_operand.vmem [shape: f32[9,128], index: 1, kind: input, shape index: {}]
  %s2 = inlined_call_operand.vmem [shape: f32[1,128], index: 2, kind: input, shape index: {}]
  %s3 = inlined_call_operand.vmem [shape: bf16[128,128], index: 3, kind: input, shape index: {}]
  %s4 = inlined_call_operand.vmem [shape: f32[1,128], index: 4, kind: input, shape index: {}]
  %s5 = inlined_call_operand.hbm [shape: f32[4,8,16,128], index: 5, kind: output, shape index: {}]
  %s6 = sld [smem:[#allocation0]]
  $region53: #{tpu_custom_call.1} parent=0
    _
  %s8 = ssub.s32 1, %s6
  %s9 = scalar_select 0, %s8, %s6
  $region1: #{tpu_custom_call.1} parent=0
    #allocation2 [shape = 'u8[131072]{0}', space=vmem, size = 0x20000, scoped, tag = 'output window, operand 0']
    #allocation3 [shape = 's32[2]{0}', space=sflag, size = 0x8, scoped, tag = 'scoped memory for tpu_custom_call.1']
    %10 = vsyncpa [#allocation3], 0
    %s11 = scalar_lea.sflag [#allocation3], 1
    %12 = vsyncpa %s11, 0
    loop: start=0, step=1, limit=6
    $region2: #{tpu_custom_call.1} parent=1 // loop_pre_header
      _
    $region3: #{tpu_custom_call.1} parent=1 // loop_header
      %s14 = sphi 0, %s18
      %p15 = scmp.ge.s32.totalorder %s14, 6
      %s21 = sphi 0, %s33
      %s22 = sphi 0, %s29
      %s23 = sphi 0, %s21
      %s24 = sphi 0, %s22
      %s25 = sphi 0, %s23
      %s26 = sphi 0, %s24
      %s40 = sphi 0, %s42
      %s43 = sphi 0, %s40
      %s44 = sphi 0, %s43
      %s60 = sphi 0, %s44
      %s64 = sphi 0, %s64
      %s66 = sphi 0, %s64
      %s67 = sphi 0, %s66
      %s81 = sphi 0, %s67
      %s85 = sphi 0, %s85
      %s87 = sphi 0, %s85
      %s88 = sphi 0, %s87
      %s102 = sphi 0, %s88
      %s106 = sphi 0, %s106
      %s108 = sphi 0, %s106
      %s109 = sphi 0, %s108
      %s123 = sphi 0, %s109
      %s127 = sphi 0, %s127
      %s129 = sphi 0, %s127
      %s130 = sphi 0, %s129
      %s144 = sphi 0, %s130
      %s154 = sphi 0, %s156
      %s157 = sphi 0, %s154
      %s158 = sphi 0, %s157
      %s174 = sphi 0, %s158
    $region4: #{tpu_custom_call.1} parent=1 // loop_header_branch
      %17 = sbr.rel (%p15) target = $region8
    $region5: #{tpu_custom_call.1} parent=1 // loop_body
      %s19 = ssub.s32 %s14, 1
      %s20 = ssub.s32 %s14, 2
      %s27 = sadd.s32 1, %s22
      %p28 = scmp.ge.s32.totalorder %s27, 2
      %s29 = scalar_select %p28, 0, %s27
      %s30 = sadd.s32 1, %s21
      %s31 = scalar_select %p28, %s30, %s21
      %p32 = scmp.ge.s32.totalorder %s31, 2
      %s33 = scalar_select %p32, 0, %s31
      %s34 = smul.u32 %s21, 2
      %s35 = sadd.s32 %s34, %s22
      %s36 = smul.u32 %s33, 2
      %s37 = sadd.s32 %s36, %s29
      %s38 = ssub.s32 %s35, %s37
      %p39 = scmp.eq.s32.totalorder %s38, 0
      %s41 = sadd.s32 %s40, 1
      %s42 = scalar_select %p39, %s40, %s41
      %p45 = pneg %p39
      %p46 = scmp.eq.s32.totalorder %s14, 3
      %p47 = por %p45, %p46
      %p48 = scmp.ne.s32.totalorder %s40, %s43
      %p49 = scmp.eq.s32.totalorder %s14, 0
      %p50 = por %p48, %p49
      %p51 = scmp.ne.s32.totalorder %s40, %s43
      %p52 = scmp.eq.s32.totalorder %s19, 3
      %p53 = por %p51, %p52
      %p54 = scmp.ne.s32.totalorder %s43, %s44
      %p55 = scmp.eq.s32.totalorder %s19, 0
      %p56 = por %p54, %p55
      %p57 = scmp.ne.s32.totalorder %s43, %s44
      %p58 = scmp.eq.s32.totalorder %s20, 3
      %p59 = por %p57, %p58
      %p61 = scmp.ne.s32.totalorder %s44, %s60
      %p62 = scmp.eq.s32.totalorder %s20, 0
      %p63 = por %p61, %p62
      %s65 = sadd.s32 %s64, 1
      %p68 = scmp.eq.s32.totalorder %s14, 3
      %p69 = scmp.ne.s32.totalorder %s64, %s66
      %p70 = scmp.eq.s32.totalorder %s14, 0
      %p71 = por %p69, %p70
      %p72 = scmp.ne.s32.totalorder %s64, %s66
      %p73 = scmp.eq.s32.totalorder %s19, 3
      %p74 = por %p72, %p73
      %p75 = scmp.ne.s32.totalorder %s66, %s67
      %p76 = scmp.eq.s32.totalorder %s19, 0
      %p77 = por %p75, %p76
      %p78 = scmp.ne.s32.totalorder %s66, %s67
      %p79 = scmp.eq.s32.totalorder %s20, 3
      %p80 = por %p78, %p79
      %p82 = scmp.ne.s32.totalorder %s67, %s81
      %p83 = scmp.eq.s32.totalorder %s20, 0
      %p84 = por %p82, %p83
      %s86 = sadd.s32 %s85, 1
      %p89 = scmp.eq.s32.totalorder %s14, 3
      %p90 = scmp.ne.s32.totalorder %s85, %s87
      %p91 = scmp.eq.s32.totalorder %s14, 0
      %p92 = por %p90, %p91
      %p93 = scmp.ne.s32.totalorder %s85, %s87
      %p94 = scmp.eq.s32.totalorder %s19, 3
      %p95 = por %p93, %p94
      %p96 = scmp.ne.s32.totalorder %s87, %s88
      %p97 = scmp.eq.s32.totalorder %s19, 0
      %p98 = por %p96, %p97
      %p99 = scmp.ne.s32.totalorder %s87, %s88
      %p100 = scmp.eq.s32.totalorder %s20, 3
      %p101 = por %p99, %p100
      %p103 = scmp.ne.s32.totalorder %s88, %s102
      %p104 = scmp.eq.s32.totalorder %s20, 0
      %p105 = por %p103, %p104
      %s107 = sadd.s32 %s106, 1
      %p110 = scmp.eq.s32.totalorder %s14, 3
      %p111 = scmp.ne.s32.totalorder %s106, %s108
      %p112 = scmp.eq.s32.totalorder %s14, 0
      %p113 = por %p111, %p112
      %p114 = scmp.ne.s32.totalorder %s106, %s108
      %p115 = scmp.eq.s32.totalorder %s19, 3
      %p116 = por %p114, %p115
      %p117 = scmp.ne.s32.totalorder %s108, %s109
      %p118 = scmp.eq.s32.totalorder %s19, 0
      %p119 = por %p117, %p118
      %p120 = scmp.ne.s32.totalorder %s108, %s109
      %p121 = scmp.eq.s32.totalorder %s20, 3
      %p122 = por %p120, %p121
      %p124 = scmp.ne.s32.totalorder %s109, %s123
      %p125 = scmp.eq.s32.totalorder %s20, 0
      %p126 = por %p124, %p125
      %s128 = sadd.s32 %s127, 1
      %p131 = scmp.eq.s32.totalorder %s14, 3
      %p132 = scmp.ne.s32.totalorder %s127, %s129
      %p133 = scmp.eq.s32.totalorder %s14, 0
      %p134 = por %p132, %p133
      %p135 = scmp.ne.s32.totalorder %s127, %s129
      %p136 = scmp.eq.s32.totalorder %s19, 3
      %p137 = por %p135, %p136
      %p138 = scmp.ne.s32.totalorder %s129, %s130
      %p139 = scmp.eq.s32.totalorder %s19, 0
      %p140 = por %p138, %p139
      %p141 = scmp.ne.s32.totalorder %s129, %s130
      %p142 = scmp.eq.s32.totalorder %s20, 3
      %p143 = por %p141, %p142
      %p145 = scmp.ne.s32.totalorder %s130, %s144
      %p146 = scmp.eq.s32.totalorder %s20, 0
      %p147 = por %p145, %p146
      %s148 = smul.u32 %s21, 2
      %s149 = sadd.s32 %s148, %s22
      %s150 = smul.u32 %s33, 2
      %s151 = sadd.s32 %s150, %s29
      %s152 = ssub.s32 %s149, %s151
      %p153 = scmp.eq.s32.totalorder %s152, 0
      %s155 = sadd.s32 %s154, 1
      %s156 = scalar_select %p153, %s154, %s155
      %p159 = pneg %p153
      %p160 = scmp.eq.s32.totalorder %s14, 3
      %p161 = por %p159, %p160
      %p162 = scmp.ne.s32.totalorder %s154, %s157
      %p163 = scmp.eq.s32.totalorder %s14, 0
      %p164 = por %p162, %p163
      %p165 = scmp.ne.s32.totalorder %s154, %s157
      %p166 = scmp.eq.s32.totalorder %s19, 3
      %p167 = por %p165, %p166
      %p168 = scmp.ne.s32.totalorder %s157, %s158
      %p169 = scmp.eq.s32.totalorder %s19, 0
      %p170 = por %p168, %p169
      %p171 = scmp.ne.s32.totalorder %s157, %s158
      %p172 = scmp.eq.s32.totalorder %s20, 3
      %p173 = por %p171, %p172
      %p175 = scmp.ne.s32.totalorder %s158, %s174
      %p176 = scmp.eq.s32.totalorder %s20, 0
      %p177 = por %p175, %p176
      %p178 = scmp.le.s32.totalorder 1, %s14
      %p179 = scmp.lt.s32.totalorder %s14, 5
      %p180 = pnand %p178, %p179
      %p181 = pneg %p180
      // Predicated region
      $region9: #{tpu_custom_call.1} parent=5 // pred_check
        _
      $region10: #{tpu_custom_call.1} parent=5 // pred_check_branch
        %183 = sbr.rel (%p180) target = $region12
      $region11: #{tpu_custom_call.1} parent=5 // pred_region
        %s184 = ssub.s32 %s14, 1
        // Predicated region
        $region13: #{tpu_custom_call.1} parent=11 // pred_check
          %p185 = pneg %p77
        $region14: #{tpu_custom_call.1} parent=11 // pred_check_branch
          %187 = sbr.rel (%p185) target = $region16
        $region15: #{tpu_custom_call.1} parent=11 // pred_region
          _
        $region16: #{tpu_custom_call.1} parent=11 // pred_fallthru
          _
        // Predicated region
        $region17: #{tpu_custom_call.1} parent=11 // pred_check
          %p188 = pneg %p98
        $region18: #{tpu_custom_call.1} parent=11 // pred_check_branch
          %190 = sbr.rel (%p188) target = $region20
        $region19: #{tpu_custom_call.1} parent=11 // pred_region
          _
        $region20: #{tpu_custom_call.1} parent=11 // pred_fallthru
          _
        // Predicated region
        $region21: #{tpu_custom_call.1} parent=11 // pred_check
          %p191 = pneg %p119
        $region22: #{tpu_custom_call.1} parent=11 // pred_check_branch
          %193 = sbr.rel (%p191) target = $region24
        $region23: #{tpu_custom_call.1} parent=11 // pred_region
          _
        $region24: #{tpu_custom_call.1} parent=11 // pred_fallthru
          _
        // Predicated region
        $region25: #{tpu_custom_call.1} parent=11 // pred_check
          %p194 = pneg %p140
        $region26: #{tpu_custom_call.1} parent=11 // pred_check_branch
          %196 = sbr.rel (%p194) target = $region28
        $region27: #{tpu_custom_call.1} parent=11 // pred_region
          _
        $region28: #{tpu_custom_call.1} parent=11 // pred_fallthru
          _
      $region12: #{tpu_custom_call.1} parent=5 // pred_fallthru
        _
      %p197 = scmp.lt.s32.totalorder %s14, 4
      // Predicated region
      $region29: #{tpu_custom_call.1} parent=5 // pred_check
        %p198 = pneg %p197
      $region30: #{tpu_custom_call.1} parent=5 // pred_check_branch
        %200 = sbr.rel (%p198) target = $region32
      $region31: #{tpu_custom_call.1} parent=5 // pred_region
        // Predicated region
        $region33: #{tpu_custom_call.1} parent=31 // pred_check
          %p201 = pneg %p50
        $region34: #{tpu_custom_call.1} parent=31 // pred_check_branch
          %203 = sbr.rel (%p201) target = $region36
        $region35: #{tpu_custom_call.1} parent=31 // pred_region
          %s204 = smul.u32 %s21, 2
          %s205 = sadd.s32 %s204, %s22
          %p206 = scmp.lt.s32.totalorder %s205, 3
          %s207 = scalar_select %p206, %s205, 3
          %s208 = smul.addr %s207, 30
          %s209 = smul.addr %s208, 4
          %s210 = scalar_lea.vmem %s0, %s209
          %s211 = smul.u32 %s21, 2
          %s212 = sadd.s32 %s211, %s22
        $region36: #{tpu_custom_call.1} parent=31 // pred_fallthru
          _
      $region32: #{tpu_custom_call.1} parent=5 // pred_fallthru
        _
      %p213 = scmp.le.s32.totalorder 1, %s14
      %p214 = scmp.lt.s32.totalorder %s14, 5
      %p215 = pnand %p213, %p214
      %p216 = pneg %p215
      // Predicated region
      $region37: #{tpu_custom_call.1} parent=5 // pred_check
        _
      $region38: #{tpu_custom_call.1} parent=5 // pred_check_branch
        %218 = sbr.rel (%p215) target = $region40
      $region39: #{tpu_custom_call.1} parent=5 // pred_region
        %s219 = ssub.s32 %s14, 1
        %s220 = smul.u32 %s23, 2
        %s221 = sadd.s32 %s220, %s24
        %p222 = scmp.lt.s32.totalorder %s221, 3
        %s223 = scalar_select %p222, %s221, 3
        %s224 = smul.addr %s223, 30
        %s225 = smul.addr %s224, 4
        %s226 = scalar_lea.vmem %s0, %s225
        %p227 = pneg %p56
        %p228 = pneg %p53
        %p229 = pneg %p77
        %p230 = pneg %p74
        %p231 = pneg %p98
        %p232 = pneg %p95
        %p233 = pneg %p119
        %p234 = pneg %p116
        %p235 = pneg %p140
        %p236 = pneg %p137
        %p237 = pneg %p170
        %p238 = pneg %p167
        %s239 = sand.u32 %s157, 1
        %s240 = scalar_lea.sflag [#allocation3], %s239
        %s241 = sand.u32 %s157, 1
        %s242 = smul.addr %s241, 128
        %s243 = scalar_lea.vmem [#allocation2], %s242
        %s244 = smul.u32 %s23, 2
        %s245 = sadd.s32 %s244, %s24
        %p246 = scmp.lt.s32.totalorder %s245, 3
        %s247 = scalar_select %p246, %s245, 3
        %s248 = smul.addr %s247, 30
        %s249 = smul.addr %s248, 4
        %s250 = scalar_lea.vmem %s0, %s249
        %s251 = smul.u32 %s23, 2
        %s252 = sadd.s32 %s251, %s24
        %s253 = smul.u32 %s23, 2
        %s254 = sadd.s32 %s253, %s24
        %v256 = vld [vmem:[%s250] sm:$0xf]
        %v257 = vld [vmem:[%s250 + $0x4] sm:$0xf]
        %v258 = vld [vmem:[%s250 + $0x8] sm:$0x1]
        %v259 = vld [vmem:[%s250 + $0xc] sm:$0xf]
        %v260 = vld [vmem:[%s250 + $0x10] sm:$0xf]
        %v261 = vld [vmem:[%s250 + $0x14] sm:$0x1]
        %v262 = vld [vmem:[%s250 + $0x18] sm:$0xf]
        %v263 = vld [vmem:[%s250 + $0x1c] sm:$0xf]
        %v264 = vld [vmem:[%s250 + $0x20] sm:$0x1]
        %v265 = vld [vmem:[%s250 + $0x24] sm:$0xf]
        %v266 = vld [vmem:[%s250 + $0x28] sm:$0xf]
        %v267 = vld [vmem:[%s250 + $0x2c] sm:$0x1]
        %v268 = vld [vmem:[%s250 + $0x30] sm:$0xf]
        %v269 = vld [vmem:[%s250 + $0x34] sm:$0xf]
        %v270 = vld [vmem:[%s250 + $0x38] sm:$0x1]
        %v271 = vld [vmem:[%s250 + $0x3c] sm:$0xf]
        %v272 = vld [vmem:[%s250 + $0x40] sm:$0xf]
        %v273 = vld [vmem:[%s250 + $0x44] sm:$0x1]
        %v274 = vld [vmem:[%s250 + $0x48] sm:$0xf]
        %v275 = vld [vmem:[%s250 + $0x4c] sm:$0xf]
        %v276 = vld [vmem:[%s250 + $0x50] sm:$0x1]
        %v277 = vld [vmem:[%s250 + $0x54] sm:$0xf]
        %v278 = vld [vmem:[%s250 + $0x58] sm:$0xf]
        %v279 = vld [vmem:[%s250 + $0x5c] sm:$0x1]
        %v280 = vld [vmem:[%s250 + $0x60] sm:$0xf]
        %v281 = vld [vmem:[%s250 + $0x64] sm:$0xf]
        %v282 = vld [vmem:[%s250 + $0x68] sm:$0x1]
        %v283 = vld [vmem:[%s250 + $0x6c] sm:$0xf]
        %v284 = vld [vmem:[%s250 + $0x70] sm:$0xf]
        %v285 = vld [vmem:[%s250 + $0x74] sm:$0x1]
        %v286 = vunpack.c.l.bf16 %v256
        %v287 = vunpack.c.l.bf16 %v257
        %v288 = vunpack.c.l.bf16 %v258
        %v289 = vunpack.c.l.bf16 %v259
        %v290 = vunpack.c.l.bf16 %v260
        %v291 = vunpack.c.l.bf16 %v261
        %v292 = vunpack.c.l.bf16 %v262
        %v293 = vunpack.c.l.bf16 %v263
        %v294 = vunpack.c.l.bf16 %v264
        %v295 = vunpack.c.l.bf16 %v265
        %v296 = vunpack.c.l.bf16 %v266
        %v297 = vunpack.c.l.bf16 %v267
        %v298 = vunpack.c.l.bf16 %v268
        %v299 = vunpack.c.l.bf16 %v269
        %v300 = vunpack.c.l.bf16 %v270
        %v301 = vunpack.c.l.bf16 %v271
        %v302 = vunpack.c.l.bf16 %v272
        %v303 = vunpack.c.l.bf16 %v273
        %v304 = vunpack.c.l.bf16 %v274
        %v305 = vunpack.c.l.bf16 %v275
        %v306 = vunpack.c.l.bf16 %v276
        %v307 = vunpack.c.l.bf16 %v277
        %v308 = vunpack.c.l.bf16 %v278
        %v309 = vunpack.c.l.bf16 %v279
        %v310 = vunpack.c.l.bf16 %v280
        %v311 = vunpack.c.l.bf16 %v281
        %v312 = vunpack.c.l.bf16 %v282
        %v313 = vunpack.c.l.bf16 %v283
        %v314 = vunpack.c.l.bf16 %v284
        %v315 = vunpack.c.l.bf16 %v285
        %v316 = vld [vmem:[%s1] sm:$0x1]
        %v317 = vlaneseq
        %v318 = vshrl.u32 %v317, 7
        %v319 = vsub.s32 0, %v318
        %v320 = vrot.slane %v316, %v319
        %v321 = vmul.f32 %v286, %v320
        %v322 = vmul.f32 %v287, %v320
        %v323 = vmul.f32 %v289, %v320
        %v324 = vmul.f32 %v290, %v320
        %v325 = vmul.f32 %v292, %v320
        %v326 = vmul.f32 %v293, %v320
        %v327 = vmul.f32 %v295, %v320
        %v328 = vmul.f32 %v296, %v320
        %v329 = vmul.f32 %v298, %v320
        %v330 = vmul.f32 %v299, %v320
        %v331 = vmul.f32 %v301, %v320
        %v332 = vmul.f32 %v302, %v320
        %v333 = vmul.f32 %v304, %v320
        %v334 = vmul.f32 %v305, %v320
        %v335 = vmul.f32 %v307, %v320
        %v336 = vmul.f32 %v308, %v320
        %v337 = vld [vmem:[%s1 + $0x3] sm:$0x1]
        %v338 = vlaneseq
        %v339 = vshrl.u32 %v338, 7
        %v340 = vsub.s32 0, %v339
        %v341 = vrot.slane %v337, %v340
        %v342 = vmul.f32 %v289, %v341
        %v343 = vmul.f32 %v290, %v341
        %v344 = vmul.f32 %v292, %v341
        %v345 = vmul.f32 %v293, %v341
        %v346 = vmul.f32 %v295, %v341
        %v347 = vmul.f32 %v296, %v341
        %v348 = vmul.f32 %v298, %v341
        %v349 = vmul.f32 %v299, %v341
        %v350 = vmul.f32 %v301, %v341
        %v351 = vmul.f32 %v302, %v341
        %v352 = vmul.f32 %v304, %v341
        %v353 = vmul.f32 %v305, %v341
        %v354 = vmul.f32 %v307, %v341
        %v355 = vmul.f32 %v308, %v341
        %v356 = vmul.f32 %v310, %v341
        %v357 = vmul.f32 %v311, %v341
        %v358 = vadd.f32 %v321, %v342
        %v359 = vadd.f32 %v322, %v343
        %v360 = vadd.f32 %v323, %v344
        %v361 = vadd.f32 %v324, %v345
        %v362 = vadd.f32 %v325, %v346
        %v363 = vadd.f32 %v326, %v347
        %v364 = vadd.f32 %v327, %v348
        %v365 = vadd.f32 %v328, %v349
        %v366 = vadd.f32 %v329, %v350
        %v367 = vadd.f32 %v330, %v351
        %v368 = vadd.f32 %v331, %v352
        %v369 = vadd.f32 %v332, %v353
        %v370 = vadd.f32 %v333, %v354
        %v371 = vadd.f32 %v334, %v355
        %v372 = vadd.f32 %v335, %v356
        %v373 = vadd.f32 %v336, %v357
        %v374 = vld [vmem:[%s1 + $0x6] sm:$0x1]
        %v375 = vlaneseq
        %v376 = vshrl.u32 %v375, 7
        %v377 = vsub.s32 0, %v376
        %v378 = vrot.slane %v374, %v377
        %v379 = vmul.f32 %v292, %v378
        %v380 = vmul.f32 %v293, %v378
        %v381 = vmul.f32 %v295, %v378
        %v382 = vmul.f32 %v296, %v378
        %v383 = vmul.f32 %v298, %v378
        %v384 = vmul.f32 %v299, %v378
        %v385 = vmul.f32 %v301, %v378
        %v386 = vmul.f32 %v302, %v378
        %v387 = vmul.f32 %v304, %v378
        %v388 = vmul.f32 %v305, %v378
        %v389 = vmul.f32 %v307, %v378
        %v390 = vmul.f32 %v308, %v378
        %v391 = vmul.f32 %v310, %v378
        %v392 = vmul.f32 %v311, %v378
        %v393 = vmul.f32 %v313, %v378
        %v394 = vmul.f32 %v314, %v378
        %v395 = vadd.f32 %v358, %v379
        %v396 = vadd.f32 %v359, %v380
        %v397 = vadd.f32 %v360, %v381
        %v398 = vadd.f32 %v361, %v382
        %v399 = vadd.f32 %v362, %v383
        %v400 = vadd.f32 %v363, %v384
        %v401 = vadd.f32 %v364, %v385
        %v402 = vadd.f32 %v365, %v386
        %v403 = vadd.f32 %v366, %v387
        %v404 = vadd.f32 %v367, %v388
        %v405 = vadd.f32 %v368, %v389
        %v406 = vadd.f32 %v369, %v390
        %v407 = vadd.f32 %v370, %v391
        %v408 = vadd.f32 %v371, %v392
        %v409 = vadd.f32 %v372, %v393
        %v410 = vadd.f32 %v373, %v394
        %v411 = vld [vmem:[%s1 + $0x1] sm:$0x1]
        %v412 = vlaneseq
        %v413 = vshrl.u32 %v412, 7
        %v414 = vsub.s32 0, %v413
        %v415 = vrot.slane %v411, %v414
        %v416 = vmul.f32 %v286, %v415
        %v417 = vmul.f32 %v287, %v415
        %v418 = vmul.f32 %v288, %v415
        %v419 = vmul.f32 %v289, %v415
        %v420 = vmul.f32 %v290, %v415
        %v421 = vmul.f32 %v291, %v415
        %v422 = vmul.f32 %v292, %v415
        %v423 = vmul.f32 %v293, %v415
        %v424 = vmul.f32 %v294, %v415
        %v425 = vmul.f32 %v295, %v415
        %v426 = vmul.f32 %v296, %v415
        %v427 = vmul.f32 %v297, %v415
        %v428 = vmul.f32 %v298, %v415
        %v429 = vmul.f32 %v299, %v415
        %v430 = vmul.f32 %v300, %v415
        %v431 = vmul.f32 %v301, %v415
        %v432 = vmul.f32 %v302, %v415
        %v433 = vmul.f32 %v303, %v415
        %v434 = vmul.f32 %v304, %v415
        %v435 = vmul.f32 %v305, %v415
        %v436 = vmul.f32 %v306, %v415
        %v437 = vmul.f32 %v307, %v415
        %v438 = vmul.f32 %v308, %v415
        %v439 = vmul.f32 %v309, %v415
        %vm464 = vcmask 1046528
        %v465 = vrot.slane %v416, 1
        %v466 = vrot.slane %v417, 1
        %v467 = vsel %vm464, %v465, %v466
        %v468 = vrot.slane %v418, 1
        %v469 = vsel %vm464, %v466, %v468
        %v470 = vrot.slane %v419, 1
        %v471 = vrot.slane %v420, 1
        %v472 = vsel %vm464, %v470, %v471
        %v473 = vrot.slane %v421, 1
        %v474 = vsel %vm464, %v471, %v473
        %v475 = vrot.slane %v422, 1
        %v476 = vrot.slane %v423, 1
        %v477 = vsel %vm464, %v475, %v476
        %v478 = vrot.slane %v424, 1
        %v479 = vsel %vm464, %v476, %v478
        %v480 = vrot.slane %v425, 1
        %v481 = vrot.slane %v426, 1
        %v482 = vsel %vm464, %v480, %v481
        %v483 = vrot.slane %v427, 1
        %v484 = vsel %vm464, %v481, %v483
        %v485 = vrot.slane %v428, 1
        %v486 = vrot.slane %v429, 1
        %v487 = vsel %vm464, %v485, %v486
        %v488 = vrot.slane %v430, 1
        %v489 = vsel %vm464, %v486, %v488
        %v490 = vrot.slane %v431, 1
        %v491 = vrot.slane %v432, 1
        %v492 = vsel %vm464, %v490, %v491
        %v493 = vrot.slane %v433, 1
        %v494 = vsel %vm464, %v491, %v493
        %v495 = vrot.slane %v434, 1
        %v496 = vrot.slane %v435, 1
        %v497 = vsel %vm464, %v495, %v496
        %v498 = vrot.slane %v436, 1
        %v499 = vsel %vm464, %v496, %v498
        %v500 = vrot.slane %v437, 1
        %v501 = vrot.slane %v438, 1
        %v502 = vsel %vm464, %v500, %v501
        %v503 = vrot.slane %v439, 1
        %v504 = vsel %vm464, %v501, %v503
        %v521 = vadd.f32 %v395, %v467
        %v522 = vadd.f32 %v396, %v469
        %v523 = vadd.f32 %v397, %v472
        %v524 = vadd.f32 %v398, %v474
        %v525 = vadd.f32 %v399, %v477
        %v526 = vadd.f32 %v400, %v479
        %v527 = vadd.f32 %v401, %v482
        %v528 = vadd.f32 %v402, %v484
        %v529 = vadd.f32 %v403, %v487
        %v530 = vadd.f32 %v404, %v489
        %v531 = vadd.f32 %v405, %v492
        %v532 = vadd.f32 %v406, %v494
        %v533 = vadd.f32 %v407, %v497
        %v534 = vadd.f32 %v408, %v499
        %v535 = vadd.f32 %v409, %v502
        %v536 = vadd.f32 %v410, %v504
        %v537 = vld [vmem:[%s1 + $0x4] sm:$0x1]
        %v538 = vlaneseq
        %v539 = vshrl.u32 %v538, 7
        %v540 = vsub.s32 0, %v539
        %v541 = vrot.slane %v537, %v540
        %v542 = vmul.f32 %v289, %v541
        %v543 = vmul.f32 %v290, %v541
        %v544 = vmul.f32 %v291, %v541
        %v545 = vmul.f32 %v292, %v541
        %v546 = vmul.f32 %v293, %v541
        %v547 = vmul.f32 %v294, %v541
        %v548 = vmul.f32 %v295, %v541
        %v549 = vmul.f32 %v296, %v541
        %v550 = vmul.f32 %v297, %v541
        %v551 = vmul.f32 %v298, %v541
        %v552 = vmul.f32 %v299, %v541
        %v553 = vmul.f32 %v300, %v541
        %v554 = vmul.f32 %v301, %v541
        %v555 = vmul.f32 %v302, %v541
        %v556 = vmul.f32 %v303, %v541
        %v557 = vmul.f32 %v304, %v541
        %v558 = vmul.f32 %v305, %v541
        %v559 = vmul.f32 %v306, %v541
        %v560 = vmul.f32 %v307, %v541
        %v561 = vmul.f32 %v308, %v541
        %v562 = vmul.f32 %v309, %v541
        %v563 = vmul.f32 %v310, %v541
        %v564 = vmul.f32 %v311, %v541
        %v565 = vmul.f32 %v312, %v541
        %v590 = vrot.slane %v542, 1
        %v591 = vrot.slane %v543, 1
        %v592 = vsel %vm464, %v590, %v591
        %v593 = vrot.slane %v544, 1
        %v594 = vsel %vm464, %v591, %v593
        %v595 = vrot.slane %v545, 1
        %v596 = vrot.slane %v546, 1
        %v597 = vsel %vm464, %v595, %v596
        %v598 = vrot.slane %v547, 1
        %v599 = vsel %vm464, %v596, %v598
        %v600 = vrot.slane %v548, 1
        %v601 = vrot.slane %v549, 1
        %v602 = vsel %vm464, %v600, %v601
        %v603 = vrot.slane %v550, 1
        %v604 = vsel %vm464, %v601, %v603
        %v605 = vrot.slane %v551, 1
        %v606 = vrot.slane %v552, 1
        %v607 = vsel %vm464, %v605, %v606
        %v608 = vrot.slane %v553, 1
        %v609 = vsel %vm464, %v606, %v608
        %v610 = vrot.slane %v554, 1
        %v611 = vrot.slane %v555, 1
        %v612 = vsel %vm464, %v610, %v611
        %v613 = vrot.slane %v556, 1
        %v614 = vsel %vm464, %v611, %v613
        %v615 = vrot.slane %v557, 1
        %v616 = vrot.slane %v558, 1
        %v617 = vsel %vm464, %v615, %v616
        %v618 = vrot.slane %v559, 1
        %v619 = vsel %vm464, %v616, %v618
        %v620 = vrot.slane %v560, 1
        %v621 = vrot.slane %v561, 1
        %v622 = vsel %vm464, %v620, %v621
        %v623 = vrot.slane %v562, 1
        %v624 = vsel %vm464, %v621, %v623
        %v625 = vrot.slane %v563, 1
        %v626 = vrot.slane %v564, 1
        %v627 = vsel %vm464, %v625, %v626
        %v628 = vrot.slane %v565, 1
        %v629 = vsel %vm464, %v626, %v628
        %v646 = vadd.f32 %v521, %v592
        %v647 = vadd.f32 %v522, %v594
        %v648 = vadd.f32 %v523, %v597
        %v649 = vadd.f32 %v524, %v599
        %v650 = vadd.f32 %v525, %v602
        %v651 = vadd.f32 %v526, %v604
        %v652 = vadd.f32 %v527, %v607
        %v653 = vadd.f32 %v528, %v609
        %v654 = vadd.f32 %v529, %v612
        %v655 = vadd.f32 %v530, %v614
        %v656 = vadd.f32 %v531, %v617
        %v657 = vadd.f32 %v532, %v619
        %v658 = vadd.f32 %v533, %v622
        %v659 = vadd.f32 %v534, %v624
        %v660 = vadd.f32 %v535, %v627
        %v661 = vadd.f32 %v536, %v629
        %v662 = vld [vmem:[%s1 + $0x7] sm:$0x1]
        %v663 = vlaneseq
        %v664 = vshrl.u32 %v663, 7
        %v665 = vsub.s32 0, %v664
        %v666 = vrot.slane %v662, %v665
        %v667 = vmul.f32 %v292, %v666
        %v668 = vmul.f32 %v293, %v666
        %v669 = vmul.f32 %v294, %v666
        %v670 = vmul.f32 %v295, %v666
        %v671 = vmul.f32 %v296, %v666
        %v672 = vmul.f32 %v297, %v666
        %v673 = vmul.f32 %v298, %v666
        %v674 = vmul.f32 %v299, %v666
        %v675 = vmul.f32 %v300, %v666
        %v676 = vmul.f32 %v301, %v666
        %v677 = vmul.f32 %v302, %v666
        %v678 = vmul.f32 %v303, %v666
        %v679 = vmul.f32 %v304, %v666
        %v680 = vmul.f32 %v305, %v666
        %v681 = vmul.f32 %v306, %v666
        %v682 = vmul.f32 %v307, %v666
        %v683 = vmul.f32 %v308, %v666
        %v684 = vmul.f32 %v309, %v666
        %v685 = vmul.f32 %v310, %v666
        %v686 = vmul.f32 %v311, %v666
        %v687 = vmul.f32 %v312, %v666
        %v688 = vmul.f32 %v313, %v666
        %v689 = vmul.f32 %v314, %v666
        %v690 = vmul.f32 %v315, %v666
        %v715 = vrot.slane %v667, 1
        %v716 = vrot.slane %v668, 1
        %v717 = vsel %vm464, %v715, %v716
        %v718 = vrot.slane %v669, 1
        %v719 = vsel %vm464, %v716, %v718
        %v720 = vrot.slane %v670, 1
        %v721 = vrot.slane %v671, 1
        %v722 = vsel %vm464, %v720, %v721
        %v723 = vrot.slane %v672, 1
        %v724 = vsel %vm464, %v721, %v723
        %v725 = vrot.slane %v673, 1
        %v726 = vrot.slane %v674, 1
        %v727 = vsel %vm464, %v725, %v726
        %v728 = vrot.slane %v675, 1
        %v729 = vsel %vm464, %v726, %v728
        %v730 = vrot.slane %v676, 1
        %v731 = vrot.slane %v677, 1
        %v732 = vsel %vm464, %v730, %v731
        %v733 = vrot.slane %v678, 1
        %v734 = vsel %vm464, %v731, %v733
        %v735 = vrot.slane %v679, 1
        %v736 = vrot.slane %v680, 1
        %v737 = vsel %vm464, %v735, %v736
        %v738 = vrot.slane %v681, 1
        %v739 = vsel %vm464, %v736, %v738
        %v740 = vrot.slane %v682, 1
        %v741 = vrot.slane %v683, 1
        %v742 = vsel %vm464, %v740, %v741
        %v743 = vrot.slane %v684, 1
        %v744 = vsel %vm464, %v741, %v743
        %v745 = vrot.slane %v685, 1
        %v746 = vrot.slane %v686, 1
        %v747 = vsel %vm464, %v745, %v746
        %v748 = vrot.slane %v687, 1
        %v749 = vsel %vm464, %v746, %v748
        %v750 = vrot.slane %v688, 1
        %v751 = vrot.slane %v689, 1
        %v752 = vsel %vm464, %v750, %v751
        %v753 = vrot.slane %v690, 1
        %v754 = vsel %vm464, %v751, %v753
        %v771 = vadd.f32 %v646, %v717
        %v772 = vadd.f32 %v647, %v719
        %v773 = vadd.f32 %v648, %v722
        %v774 = vadd.f32 %v649, %v724
        %v775 = vadd.f32 %v650, %v727
        %v776 = vadd.f32 %v651, %v729
        %v777 = vadd.f32 %v652, %v732
        %v778 = vadd.f32 %v653, %v734
        %v779 = vadd.f32 %v654, %v737
        %v780 = vadd.f32 %v655, %v739
        %v781 = vadd.f32 %v656, %v742
        %v782 = vadd.f32 %v657, %v744
        %v783 = vadd.f32 %v658, %v747
        %v784 = vadd.f32 %v659, %v749
        %v785 = vadd.f32 %v660, %v752
        %v786 = vadd.f32 %v661, %v754
        %v787 = vld [vmem:[%s1 + $0x2] sm:$0x1]
        %v788 = vlaneseq
        %v789 = vshrl.u32 %v788, 7
        %v790 = vsub.s32 0, %v789
        %v791 = vrot.slane %v787, %v790
        %v792 = vmul.f32 %v286, %v791
        %v793 = vmul.f32 %v287, %v791
        %v794 = vmul.f32 %v288, %v791
        %v795 = vmul.f32 %v289, %v791
        %v796 = vmul.f32 %v290, %v791
        %v797 = vmul.f32 %v291, %v791
        %v798 = vmul.f32 %v292, %v791
        %v799 = vmul.f32 %v293, %v791
        %v800 = vmul.f32 %v294, %v791
        %v801 = vmul.f32 %v295, %v791
        %v802 = vmul.f32 %v296, %v791
        %v803 = vmul.f32 %v297, %v791
        %v804 = vmul.f32 %v298, %v791
        %v805 = vmul.f32 %v299, %v791
        %v806 = vmul.f32 %v300, %v791
        %v807 = vmul.f32 %v301, %v791
        %v808 = vmul.f32 %v302, %v791
        %v809 = vmul.f32 %v303, %v791
        %v810 = vmul.f32 %v304, %v791
        %v811 = vmul.f32 %v305, %v791
        %v812 = vmul.f32 %v306, %v791
        %v813 = vmul.f32 %v307, %v791
        %v814 = vmul.f32 %v308, %v791
        %v815 = vmul.f32 %v309, %v791
        %vm840 = vcmask 1045504
        %v841 = vrot.slane %v792, 2
        %v842 = vrot.slane %v793, 2
        %v843 = vsel %vm840, %v841, %v842
        %v844 = vrot.slane %v794, 2
        %v845 = vsel %vm840, %v842, %v844
        %v846 = vrot.slane %v795, 2
        %v847 = vrot.slane %v796, 2
        %v848 = vsel %vm840, %v846, %v847
        %v849 = vrot.slane %v797, 2
        %v850 = vsel %vm840, %v847, %v849
        %v851 = vrot.slane %v798, 2
        %v852 = vrot.slane %v799, 2
        %v853 = vsel %vm840, %v851, %v852
        %v854 = vrot.slane %v800, 2
        %v855 = vsel %vm840, %v852, %v854
        %v856 = vrot.slane %v801, 2
        %v857 = vrot.slane %v802, 2
        %v858 = vsel %vm840, %v856, %v857
        %v859 = vrot.slane %v803, 2
        %v860 = vsel %vm840, %v857, %v859
        %v861 = vrot.slane %v804, 2
        %v862 = vrot.slane %v805, 2
        %v863 = vsel %vm840, %v861, %v862
        %v864 = vrot.slane %v806, 2
        %v865 = vsel %vm840, %v862, %v864
        %v866 = vrot.slane %v807, 2
        %v867 = vrot.slane %v808, 2
        %v868 = vsel %vm840, %v866, %v867
        %v869 = vrot.slane %v809, 2
        %v870 = vsel %vm840, %v867, %v869
        %v871 = vrot.slane %v810, 2
        %v872 = vrot.slane %v811, 2
        %v873 = vsel %vm840, %v871, %v872
        %v874 = vrot.slane %v812, 2
        %v875 = vsel %vm840, %v872, %v874
        %v876 = vrot.slane %v813, 2
        %v877 = vrot.slane %v814, 2
        %v878 = vsel %vm840, %v876, %v877
        %v879 = vrot.slane %v815, 2
        %v880 = vsel %vm840, %v877, %v879
        %v897 = vadd.f32 %v771, %v843
        %v898 = vadd.f32 %v772, %v845
        %v899 = vadd.f32 %v773, %v848
        %v900 = vadd.f32 %v774, %v850
        %v901 = vadd.f32 %v775, %v853
        %v902 = vadd.f32 %v776, %v855
        %v903 = vadd.f32 %v777, %v858
        %v904 = vadd.f32 %v778, %v860
        %v905 = vadd.f32 %v779, %v863
        %v906 = vadd.f32 %v780, %v865
        %v907 = vadd.f32 %v781, %v868
        %v908 = vadd.f32 %v782, %v870
        %v909 = vadd.f32 %v783, %v873
        %v910 = vadd.f32 %v784, %v875
        %v911 = vadd.f32 %v785, %v878
        %v912 = vadd.f32 %v786, %v880
        %v913 = vld [vmem:[%s1 + $0x5] sm:$0x1]
        %v914 = vlaneseq
        %v915 = vshrl.u32 %v914, 7
        %v916 = vsub.s32 0, %v915
        %v917 = vrot.slane %v913, %v916
        %v918 = vmul.f32 %v289, %v917
        %v919 = vmul.f32 %v290, %v917
        %v920 = vmul.f32 %v291, %v917
        %v921 = vmul.f32 %v292, %v917
        %v922 = vmul.f32 %v293, %v917
        %v923 = vmul.f32 %v294, %v917
        %v924 = vmul.f32 %v295, %v917
        %v925 = vmul.f32 %v296, %v917
        %v926 = vmul.f32 %v297, %v917
        %v927 = vmul.f32 %v298, %v917
        %v928 = vmul.f32 %v299, %v917
        %v929 = vmul.f32 %v300, %v917
        %v930 = vmul.f32 %v301, %v917
        %v931 = vmul.f32 %v302, %v917
        %v932 = vmul.f32 %v303, %v917
        %v933 = vmul.f32 %v304, %v917
        %v934 = vmul.f32 %v305, %v917
        %v935 = vmul.f32 %v306, %v917
        %v936 = vmul.f32 %v307, %v917
        %v937 = vmul.f32 %v308, %v917
        %v938 = vmul.f32 %v309, %v917
        %v939 = vmul.f32 %v310, %v917
        %v940 = vmul.f32 %v311, %v917
        %v941 = vmul.f32 %v312, %v917
        %v966 = vrot.slane %v918, 2
        %v967 = vrot.slane %v919, 2
        %v968 = vsel %vm840, %v966, %v967
        %v969 = vrot.slane %v920, 2
        %v970 = vsel %vm840, %v967, %v969
        %v971 = vrot.slane %v921, 2
        %v972 = vrot.slane %v922, 2
        %v973 = vsel %vm840, %v971, %v972
        %v974 = vrot.slane %v923, 2
        %v975 = vsel %vm840, %v972, %v974
        %v976 = vrot.slane %v924, 2
        %v977 = vrot.slane %v925, 2
        %v978 = vsel %vm840, %v976, %v977
        %v979 = vrot.slane %v926, 2
        %v980 = vsel %vm840, %v977, %v979
        %v981 = vrot.slane %v927, 2
        %v982 = vrot.slane %v928, 2
        %v983 = vsel %vm840, %v981, %v982
        %v984 = vrot.slane %v929, 2
        %v985 = vsel %vm840, %v982, %v984
        %v986 = vrot.slane %v930, 2
        %v987 = vrot.slane %v931, 2
        %v988 = vsel %vm840, %v986, %v987
        %v989 = vrot.slane %v932, 2
        %v990 = vsel %vm840, %v987, %v989
        %v991 = vrot.slane %v933, 2
        %v992 = vrot.slane %v934, 2
        %v993 = vsel %vm840, %v991, %v992
        %v994 = vrot.slane %v935, 2
        %v995 = vsel %vm840, %v992, %v994
        %v996 = vrot.slane %v936, 2
        %v997 = vrot.slane %v937, 2
        %v998 = vsel %vm840, %v996, %v997
        %v999 = vrot.slane %v938, 2
        %v1000 = vsel %vm840, %v997, %v999
        %v1001 = vrot.slane %v939, 2
        %v1002 = vrot.slane %v940, 2
        %v1003 = vsel %vm840, %v1001, %v1002
        %v1004 = vrot.slane %v941, 2
        %v1005 = vsel %vm840, %v1002, %v1004
        %v1022 = vadd.f32 %v897, %v968
        %v1023 = vadd.f32 %v898, %v970
        %v1024 = vadd.f32 %v899, %v973
        %v1025 = vadd.f32 %v900, %v975
        %v1026 = vadd.f32 %v901, %v978
        %v1027 = vadd.f32 %v902, %v980
        %v1028 = vadd.f32 %v903, %v983
        %v1029 = vadd.f32 %v904, %v985
        %v1030 = vadd.f32 %v905, %v988
        %v1031 = vadd.f32 %v906, %v990
        %v1032 = vadd.f32 %v907, %v993
        %v1033 = vadd.f32 %v908, %v995
        %v1034 = vadd.f32 %v909, %v998
        %v1035 = vadd.f32 %v910, %v1000
        %v1036 = vadd.f32 %v911, %v1003
        %v1037 = vadd.f32 %v912, %v1005
        %v1038 = vld [vmem:[%s1 + $0x8] sm:$0x1]
        %v1039 = vlaneseq
        %v1040 = vshrl.u32 %v1039, 7
        %v1041 = vsub.s32 0, %v1040
        %v1042 = vrot.slane %v1038, %v1041
        %v1043 = vmul.f32 %v292, %v1042
        %v1044 = vmul.f32 %v293, %v1042
        %v1045 = vmul.f32 %v294, %v1042
        %v1046 = vmul.f32 %v295, %v1042
        %v1047 = vmul.f32 %v296, %v1042
        %v1048 = vmul.f32 %v297, %v1042
        %v1049 = vmul.f32 %v298, %v1042
        %v1050 = vmul.f32 %v299, %v1042
        %v1051 = vmul.f32 %v300, %v1042
        %v1052 = vmul.f32 %v301, %v1042
        %v1053 = vmul.f32 %v302, %v1042
        %v1054 = vmul.f32 %v303, %v1042
        %v1055 = vmul.f32 %v304, %v1042
        %v1056 = vmul.f32 %v305, %v1042
        %v1057 = vmul.f32 %v306, %v1042
        %v1058 = vmul.f32 %v307, %v1042
        %v1059 = vmul.f32 %v308, %v1042
        %v1060 = vmul.f32 %v309, %v1042
        %v1061 = vmul.f32 %v310, %v1042
        %v1062 = vmul.f32 %v311, %v1042
        %v1063 = vmul.f32 %v312, %v1042
        %v1064 = vmul.f32 %v313, %v1042
        %v1065 = vmul.f32 %v314, %v1042
        %v1066 = vmul.f32 %v315, %v1042
        %v1091 = vrot.slane %v1043, 2
        %v1092 = vrot.slane %v1044, 2
        %v1093 = vsel %vm840, %v1091, %v1092
        %v1094 = vrot.slane %v1045, 2
        %v1095 = vsel %vm840, %v1092, %v1094
        %v1096 = vrot.slane %v1046, 2
        %v1097 = vrot.slane %v1047, 2
        %v1098 = vsel %vm840, %v1096, %v1097
        %v1099 = vrot.slane %v1048, 2
        %v1100 = vsel %vm840, %v1097, %v1099
        %v1101 = vrot.slane %v1049, 2
        %v1102 = vrot.slane %v1050, 2
        %v1103 = vsel %vm840, %v1101, %v1102
        %v1104 = vrot.slane %v1051, 2
        %v1105 = vsel %vm840, %v1102, %v1104
        %v1106 = vrot.slane %v1052, 2
        %v1107 = vrot.slane %v1053, 2
        %v1108 = vsel %vm840, %v1106, %v1107
        %v1109 = vrot.slane %v1054, 2
        %v1110 = vsel %vm840, %v1107, %v1109
        %v1111 = vrot.slane %v1055, 2
        %v1112 = vrot.slane %v1056, 2
        %v1113 = vsel %vm840, %v1111, %v1112
        %v1114 = vrot.slane %v1057, 2
        %v1115 = vsel %vm840, %v1112, %v1114
        %v1116 = vrot.slane %v1058, 2
        %v1117 = vrot.slane %v1059, 2
        %v1118 = vsel %vm840, %v1116, %v1117
        %v1119 = vrot.slane %v1060, 2
        %v1120 = vsel %vm840, %v1117, %v1119
        %v1121 = vrot.slane %v1061, 2
        %v1122 = vrot.slane %v1062, 2
        %v1123 = vsel %vm840, %v1121, %v1122
        %v1124 = vrot.slane %v1063, 2
        %v1125 = vsel %vm840, %v1122, %v1124
        %v1126 = vrot.slane %v1064, 2
        %v1127 = vrot.slane %v1065, 2
        %v1128 = vsel %vm840, %v1126, %v1127
        %v1129 = vrot.slane %v1066, 2
        %v1130 = vsel %vm840, %v1127, %v1129
        %v1147 = vadd.f32 %v1022, %v1093
        %v1148 = vadd.f32 %v1023, %v1095
        %v1149 = vadd.f32 %v1024, %v1098
        %v1150 = vadd.f32 %v1025, %v1100
        %v1151 = vadd.f32 %v1026, %v1103
        %v1152 = vadd.f32 %v1027, %v1105
        %v1153 = vadd.f32 %v1028, %v1108
        %v1154 = vadd.f32 %v1029, %v1110
        %v1155 = vadd.f32 %v1030, %v1113
        %v1156 = vadd.f32 %v1031, %v1115
        %v1157 = vadd.f32 %v1032, %v1118
        %v1158 = vadd.f32 %v1033, %v1120
        %v1159 = vadd.f32 %v1034, %v1123
        %v1160 = vadd.f32 %v1035, %v1125
        %v1161 = vadd.f32 %v1036, %v1128
        %v1162 = vadd.f32 %v1037, %v1130
        %v1163 = vld [vmem:[%s2] sm:$0x1]
        %v1165 = vlaneseq
        %v1166 = vshrl.u32 %v1165, 7
        %v1167 = vsub.s32 0, %v1166
        %v1168 = vrot.slane %v1163, %v1167
        %v1170 = vadd.f32 %v1147, %v1168
        %v1171 = vadd.f32 %v1148, %v1168
        %v1172 = vadd.f32 %v1149, %v1168
        %v1173 = vadd.f32 %v1150, %v1168
        %v1174 = vadd.f32 %v1151, %v1168
        %v1175 = vadd.f32 %v1152, %v1168
        %v1176 = vadd.f32 %v1153, %v1168
        %v1177 = vadd.f32 %v1154, %v1168
        %v1178 = vadd.f32 %v1155, %v1168
        %v1179 = vadd.f32 %v1156, %v1168
        %v1180 = vadd.f32 %v1157, %v1168
        %v1181 = vadd.f32 %v1158, %v1168
        %v1182 = vadd.f32 %v1159, %v1168
        %v1183 = vadd.f32 %v1160, %v1168
        %v1184 = vadd.f32 %v1161, %v1168
        %v1185 = vadd.f32 %v1162, %v1168
        %v1186 = vadd.f32 %v1170, 3.0
        %v1187 = vadd.f32 %v1171, 3.0
        %v1188 = vadd.f32 %v1172, 3.0
        %v1189 = vadd.f32 %v1173, 3.0
        %v1190 = vadd.f32 %v1174, 3.0
        %v1191 = vadd.f32 %v1175, 3.0
        %v1192 = vadd.f32 %v1176, 3.0
        %v1193 = vadd.f32 %v1177, 3.0
        %v1194 = vadd.f32 %v1178, 3.0
        %v1195 = vadd.f32 %v1179, 3.0
        %v1196 = vadd.f32 %v1180, 3.0
        %v1197 = vadd.f32 %v1181, 3.0
        %v1198 = vadd.f32 %v1182, 3.0
        %v1199 = vadd.f32 %v1183, 3.0
        %v1200 = vadd.f32 %v1184, 3.0
        %v1201 = vadd.f32 %v1185, 3.0
        %v1202 = vmax.f32 %v1186, 0.0
        %v1203 = vmax.f32 %v1187, 0.0
        %v1204 = vmax.f32 %v1188, 0.0
        %v1205 = vmax.f32 %v1189, 0.0
        %v1206 = vmax.f32 %v1190, 0.0
        %v1207 = vmax.f32 %v1191, 0.0
        %v1208 = vmax.f32 %v1192, 0.0
        %v1209 = vmax.f32 %v1193, 0.0
        %v1210 = vmax.f32 %v1194, 0.0
        %v1211 = vmax.f32 %v1195, 0.0
        %v1212 = vmax.f32 %v1196, 0.0
        %v1213 = vmax.f32 %v1197, 0.0
        %v1214 = vmax.f32 %v1198, 0.0
        %v1215 = vmax.f32 %v1199, 0.0
        %v1216 = vmax.f32 %v1200, 0.0
        %v1217 = vmax.f32 %v1201, 0.0
        %v1218 = vmin.f32 %v1202, 6.0
        %v1219 = vmin.f32 %v1203, 6.0
        %v1220 = vmin.f32 %v1204, 6.0
        %v1221 = vmin.f32 %v1205, 6.0
        %v1222 = vmin.f32 %v1206, 6.0
        %v1223 = vmin.f32 %v1207, 6.0
        %v1224 = vmin.f32 %v1208, 6.0
        %v1225 = vmin.f32 %v1209, 6.0
        %v1226 = vmin.f32 %v1210, 6.0
        %v1227 = vmin.f32 %v1211, 6.0
        %v1228 = vmin.f32 %v1212, 6.0
        %v1229 = vmin.f32 %v1213, 6.0
        %v1230 = vmin.f32 %v1214, 6.0
        %v1231 = vmin.f32 %v1215, 6.0
        %v1232 = vmin.f32 %v1216, 6.0
        %v1233 = vmin.f32 %v1217, 6.0
        %v1234 = vmul.f32 %v1170, %v1218
        %v1235 = vmul.f32 %v1171, %v1219
        %v1236 = vmul.f32 %v1172, %v1220
        %v1237 = vmul.f32 %v1173, %v1221
        %v1238 = vmul.f32 %v1174, %v1222
        %v1239 = vmul.f32 %v1175, %v1223
        %v1240 = vmul.f32 %v1176, %v1224
        %v1241 = vmul.f32 %v1177, %v1225
        %v1242 = vmul.f32 %v1178, %v1226
        %v1243 = vmul.f32 %v1179, %v1227
        %v1244 = vmul.f32 %v1180, %v1228
        %v1245 = vmul.f32 %v1181, %v1229
        %v1246 = vmul.f32 %v1182, %v1230
        %v1247 = vmul.f32 %v1183, %v1231
        %v1248 = vmul.f32 %v1184, %v1232
        %v1249 = vmul.f32 %v1185, %v1233
        %v1250 = vmul.f32 %v1234, 0.16666667
        %v1251 = vmul.f32 %v1235, 0.16666667
        %v1252 = vmul.f32 %v1236, 0.16666667
        %v1253 = vmul.f32 %v1237, 0.16666667
        %v1254 = vmul.f32 %v1238, 0.16666667
        %v1255 = vmul.f32 %v1239, 0.16666667
        %v1256 = vmul.f32 %v1240, 0.16666667
        %v1257 = vmul.f32 %v1241, 0.16666667
        %v1258 = vmul.f32 %v1242, 0.16666667
        %v1259 = vmul.f32 %v1243, 0.16666667
        %v1260 = vmul.f32 %v1244, 0.16666667
        %v1261 = vmul.f32 %v1245, 0.16666667
        %v1262 = vmul.f32 %v1246, 0.16666667
        %v1263 = vmul.f32 %v1247, 0.16666667
        %v1264 = vmul.f32 %v1248, 0.16666667
        %v1265 = vmul.f32 %v1249, 0.16666667
        %v1266 = vpack.c.bf16 %v1251, %v1250
        %v1267 = vpack.c.bf16 %v1253, %v1252
        %v1268 = vpack.c.bf16 %v1255, %v1254
        %v1269 = vpack.c.bf16 %v1257, %v1256
        %v1270 = vpack.c.bf16 %v1259, %v1258
        %v1271 = vpack.c.bf16 %v1261, %v1260
        %v1272 = vpack.c.bf16 %v1263, %v1262
        %v1273 = vpack.c.bf16 %v1265, %v1264
        %v1274 = vld [vmem:[%s3] sm:$0xf]
        %v1275 = vld [vmem:[%s3 + $0x4] sm:$0xf]
        %v1276 = vld [vmem:[%s3 + $0x8] sm:$0xf]
        %v1277 = vld [vmem:[%s3 + $0xc] sm:$0xf]
        %v1278 = vld [vmem:[%s3 + $0x10] sm:$0xf]
        %v1279 = vld [vmem:[%s3 + $0x14] sm:$0xf]
        %v1280 = vld [vmem:[%s3 + $0x18] sm:$0xf]
        %v1281 = vld [vmem:[%s3 + $0x1c] sm:$0xf]
        %v1282 = vld [vmem:[%s3 + $0x20] sm:$0xf]
        %v1283 = vld [vmem:[%s3 + $0x24] sm:$0xf]
        %v1284 = vld [vmem:[%s3 + $0x28] sm:$0xf]
        %v1285 = vld [vmem:[%s3 + $0x2c] sm:$0xf]
        %v1286 = vld [vmem:[%s3 + $0x30] sm:$0xf]
        %v1287 = vld [vmem:[%s3 + $0x34] sm:$0xf]
        %v1288 = vld [vmem:[%s3 + $0x38] sm:$0xf]
        %v1289 = vld [vmem:[%s3 + $0x3c] sm:$0xf]
        %v1290 = vld [vmem:[%s4] sm:$0x1]
        %v1292 = vlaneseq
        %v1293 = vshrl.u32 %v1292, 7
        %v1294 = vsub.s32 0, %v1293
        %v1295 = vrot.slane %v1290, %v1294
        %v1313 = vunpack.c.l.b16 %v1274
        %v1314 = vunpack.c.l.b16 %v1275
        %v1315 = vunpack.c.l.b16 %v1276
        %v1316 = vunpack.c.l.b16 %v1277
        %v1317 = vunpack.c.l.b16 %v1278
        %v1318 = vunpack.c.l.b16 %v1279
        %v1319 = vunpack.c.l.b16 %v1280
        %v1320 = vunpack.c.l.b16 %v1281
        %v1321 = vunpack.c.l.b16 %v1282
        %v1322 = vunpack.c.l.b16 %v1283
        %v1323 = vunpack.c.l.b16 %v1284
        %v1324 = vunpack.c.l.b16 %v1285
        %v1325 = vunpack.c.l.b16 %v1286
        %v1326 = vunpack.c.l.b16 %v1287
        %v1327 = vunpack.c.l.b16 %v1288
        %v1328 = vunpack.c.l.b16 %v1289
        %v1329 = vpack.c.b16 %v1314, %v1313
        %v1330 = vpack.c.b16 %v1316, %v1315
        %v1331 = vpack.c.b16 %v1318, %v1317
        %v1332 = vpack.c.b16 %v1320, %v1319
        %v1333 = vpack.c.b16 %v1322, %v1321
        %v1334 = vpack.c.b16 %v1324, %v1323
        %v1335 = vpack.c.b16 %v1326, %v1325
        %v1336 = vpack.c.b16 %v1328, %v1327
        %1345 = vmatprep.subr.bf16.mxu0 0
        %1346 = vmatpush1.bf16.msra.mxu0 %v1336
        %1347 = vmatprep.subr.bf16.mxu0 0
        %1348 = vmatpush1.bf16.msra.mxu0 %v1335
        %1349 = vmatprep.subr.bf16.mxu0 0
        %1350 = vmatpush1.bf16.msra.mxu0 %v1334
        %1351 = vmatprep.subr.bf16.mxu0 0
        %1352 = vmatpush1.bf16.msra.mxu0 %v1333
        %1353 = vmatprep.subr.bf16.mxu0 0
        %1354 = vmatpush1.bf16.msra.mxu0 %v1332
        %1355 = vmatprep.subr.bf16.mxu0 0
        %1356 = vmatpush1.bf16.msra.mxu0 %v1331
        %1357 = vmatprep.subr.bf16.mxu0 0
        %1358 = vmatpush1.bf16.msra.mxu0 %v1330
        %1359 = vmatprep.subr.bf16.mxu0 0
        %1360 = vmatpush1.bf16.msra.mxu0 %v1329
        %1361 = vmatprep.subr.bf16.mxu0 0
        %1362 = vmatpush2.bf16.msra.mxu0 0
        %1363 = vmatprep.subr.bf16.mxu0 0
        %1364 = vmatpush2.bf16.msra.mxu0 0
        %1365 = vmatprep.subr.bf16.mxu0 0
        %1366 = vmatpush2.bf16.msra.mxu0 0
        %1367 = vmatprep.subr.bf16.mxu0 0
        %1368 = vmatpush2.bf16.msra.mxu0 0
        %1369 = vmatprep.subr.bf16.mxu0 0
        %1370 = vmatpush2.bf16.msra.mxu0 0
        %1371 = vmatprep.subr.bf16.mxu0 0
        %1372 = vmatpush2.bf16.msra.mxu0 0
        %1373 = vmatprep.subr.bf16.mxu0 0
        %1374 = vmatpush2.bf16.msra.mxu0 0
        %1375 = vmatprep.subr.bf16.mxu0 0
        %1376 = vmatpush2.bf16.msra.mxu0 0
        %1377 = vmatprep.mubr.bf16.mxu0 0
        %1378 = vmatmul.mubr.bf16.gmra.mxu0 %v1266
        %v1379 = vpop.f32.mrf.mxu0
        %v1380 = vadd.f32 %v1295, %v1379
        %v1381 = vpop.f32.mrf.mxu0
        %v1382 = vpop.f32.mrf.mxu0
        %v1383 = vadd.f32 %v1295, %v1382
        %v1384 = vpop.f32.mrf.mxu0
        %1385 = vmatprep.mubr.bf16.mxu0 0
        %1386 = vmatmul.mubr.bf16.gmra.mxu0 %v1267
        %v1387 = vpop.f32.mrf.mxu0
        %v1388 = vadd.f32 %v1295, %v1387
        %v1389 = vpop.f32.mrf.mxu0
        %v1390 = vpop.f32.mrf.mxu0
        %v1391 = vadd.f32 %v1295, %v1390
        %v1392 = vpop.f32.mrf.mxu0
        %1393 = vmatprep.mubr.bf16.mxu0 0
        %1394 = vmatmul.mubr.bf16.gmra.mxu0 %v1268
        %v1395 = vpop.f32.mrf.mxu0
        %v1396 = vadd.f32 %v1295, %v1395
        %v1397 = vpop.f32.mrf.mxu0
        %v1398 = vpop.f32.mrf.mxu0
        %v1399 = vadd.f32 %v1295, %v1398
        %v1400 = vpop.f32.mrf.mxu0
        %1401 = vmatprep.mubr.bf16.mxu0 0
        %1402 = vmatmul.mubr.bf16.gmra.mxu0 %v1269
        %v1403 = vpop.f32.mrf.mxu0
        %v1404 = vadd.f32 %v1295, %v1403
        %v1405 = vpop.f32.mrf.mxu0
        %v1406 = vpop.f32.mrf.mxu0
        %v1407 = vadd.f32 %v1295, %v1406
        %v1408 = vpop.f32.mrf.mxu0
        %1409 = vmatprep.mubr.bf16.mxu0 0
        %1410 = vmatmul.mubr.bf16.gmra.mxu0 %v1270
        %v1411 = vpop.f32.mrf.mxu0
        %v1412 = vadd.f32 %v1295, %v1411
        %v1413 = vpop.f32.mrf.mxu0
        %v1414 = vpop.f32.mrf.mxu0
        %v1415 = vadd.f32 %v1295, %v1414
        %v1416 = vpop.f32.mrf.mxu0
        %1417 = vmatprep.mubr.bf16.mxu0 0
        %1418 = vmatmul.mubr.bf16.gmra.mxu0 %v1271
        %v1419 = vpop.f32.mrf.mxu0
        %v1420 = vadd.f32 %v1295, %v1419
        %v1421 = vpop.f32.mrf.mxu0
        %v1422 = vpop.f32.mrf.mxu0
        %v1423 = vadd.f32 %v1295, %v1422
        %v1424 = vpop.f32.mrf.mxu0
        %1425 = vmatprep.mubr.bf16.mxu0 0
        %1426 = vmatmul.mubr.bf16.gmra.mxu0 %v1272
        %v1427 = vpop.f32.mrf.mxu0
        %v1428 = vadd.f32 %v1295, %v1427
        %v1429 = vpop.f32.mrf.mxu0
        %v1430 = vpop.f32.mrf.mxu0
        %v1431 = vadd.f32 %v1295, %v1430
        %v1432 = vpop.f32.mrf.mxu0
        %1433 = vmatprep.mubr.bf16.mxu0 0
        %1434 = vmatmul.mubr.bf16.gmra.mxu0 %v1273
        %v1435 = vpop.f32.mrf.mxu0
        %v1436 = vadd.f32 %v1295, %v1435
        %v1437 = vpop.f32.mrf.mxu0
        %v1438 = vpop.f32.mrf.mxu0
        %v1439 = vadd.f32 %v1295, %v1438
        %v1440 = vpop.f32.mrf.mxu0
        %1441 = vdwg.mxu0
        %v1442 = vadd.f32 %v1380, 3.0
        %v1443 = vadd.f32 %v1383, 3.0
        %v1444 = vadd.f32 %v1388, 3.0
        %v1445 = vadd.f32 %v1391, 3.0
        %v1446 = vadd.f32 %v1396, 3.0
        %v1447 = vadd.f32 %v1399, 3.0
        %v1448 = vadd.f32 %v1404, 3.0
        %v1449 = vadd.f32 %v1407, 3.0
        %v1450 = vadd.f32 %v1412, 3.0
        %v1451 = vadd.f32 %v1415, 3.0
        %v1452 = vadd.f32 %v1420, 3.0
        %v1453 = vadd.f32 %v1423, 3.0
        %v1454 = vadd.f32 %v1428, 3.0
        %v1455 = vadd.f32 %v1431, 3.0
        %v1456 = vadd.f32 %v1436, 3.0
        %v1457 = vadd.f32 %v1439, 3.0
        %v1458 = vmax.f32 %v1442, 0.0
        %v1459 = vmax.f32 %v1443, 0.0
        %v1460 = vmax.f32 %v1444, 0.0
        %v1461 = vmax.f32 %v1445, 0.0
        %v1462 = vmax.f32 %v1446, 0.0
        %v1463 = vmax.f32 %v1447, 0.0
        %v1464 = vmax.f32 %v1448, 0.0
        %v1465 = vmax.f32 %v1449, 0.0
        %v1466 = vmax.f32 %v1450, 0.0
        %v1467 = vmax.f32 %v1451, 0.0
        %v1468 = vmax.f32 %v1452, 0.0
        %v1469 = vmax.f32 %v1453, 0.0
        %v1470 = vmax.f32 %v1454, 0.0
        %v1471 = vmax.f32 %v1455, 0.0
        %v1472 = vmax.f32 %v1456, 0.0
        %v1473 = vmax.f32 %v1457, 0.0
        %v1474 = vmin.f32 %v1458, 6.0
        %v1475 = vmin.f32 %v1459, 6.0
        %v1476 = vmin.f32 %v1460, 6.0
        %v1477 = vmin.f32 %v1461, 6.0
        %v1478 = vmin.f32 %v1462, 6.0
        %v1479 = vmin.f32 %v1463, 6.0
        %v1480 = vmin.f32 %v1464, 6.0
        %v1481 = vmin.f32 %v1465, 6.0
        %v1482 = vmin.f32 %v1466, 6.0
        %v1483 = vmin.f32 %v1467, 6.0
        %v1484 = vmin.f32 %v1468, 6.0
        %v1485 = vmin.f32 %v1469, 6.0
        %v1486 = vmin.f32 %v1470, 6.0
        %v1487 = vmin.f32 %v1471, 6.0
        %v1488 = vmin.f32 %v1472, 6.0
        %v1489 = vmin.f32 %v1473, 6.0
        %v1490 = vmul.f32 %v1380, %v1474
        %v1491 = vmul.f32 %v1383, %v1475
        %v1492 = vmul.f32 %v1388, %v1476
        %v1493 = vmul.f32 %v1391, %v1477
        %v1494 = vmul.f32 %v1396, %v1478
        %v1495 = vmul.f32 %v1399, %v1479
        %v1496 = vmul.f32 %v1404, %v1480
        %v1497 = vmul.f32 %v1407, %v1481
        %v1498 = vmul.f32 %v1412, %v1482
        %v1499 = vmul.f32 %v1415, %v1483
        %v1500 = vmul.f32 %v1420, %v1484
        %v1501 = vmul.f32 %v1423, %v1485
        %v1502 = vmul.f32 %v1428, %v1486
        %v1503 = vmul.f32 %v1431, %v1487
        %v1504 = vmul.f32 %v1436, %v1488
        %v1505 = vmul.f32 %v1439, %v1489
        %v1506 = vmul.f32 %v1490, 0.16666667
        %v1507 = vmul.f32 %v1491, 0.16666667
        %v1508 = vmul.f32 %v1492, 0.16666667
        %v1509 = vmul.f32 %v1493, 0.16666667
        %v1510 = vmul.f32 %v1494, 0.16666667
        %v1511 = vmul.f32 %v1495, 0.16666667
        %v1512 = vmul.f32 %v1496, 0.16666667
        %v1513 = vmul.f32 %v1497, 0.16666667
        %v1514 = vmul.f32 %v1498, 0.16666667
        %v1515 = vmul.f32 %v1499, 0.16666667
        %v1516 = vmul.f32 %v1500, 0.16666667
        %v1517 = vmul.f32 %v1501, 0.16666667
        %v1518 = vmul.f32 %v1502, 0.16666667
        %v1519 = vmul.f32 %v1503, 0.16666667
        %v1520 = vmul.f32 %v1504, 0.16666667
        %v1521 = vmul.f32 %v1505, 0.16666667
        %1522 = vst [vmem:[%s243] sm:$0xff] %v1506
        %1523 = vst [vmem:[%s243 + $0x8] sm:$0xff] %v1507
        %1524 = vst [vmem:[%s243 + $0x10] sm:$0xff] %v1508
        %1525 = vst [vmem:[%s243 + $0x18] sm:$0xff] %v1509
        %1526 = vst [vmem:[%s243 + $0x20] sm:$0xff] %v1510
        %1527 = vst [vmem:[%s243 + $0x28] sm:$0xff] %v1511
        %1528 = vst [vmem:[%s243 + $0x30] sm:$0xff] %v1512
        %1529 = vst [vmem:[%s243 + $0x38] sm:$0xff] %v1513
        %1530 = vst [vmem:[%s243 + $0x40] sm:$0xff] %v1514
        %1531 = vst [vmem:[%s243 + $0x48] sm:$0xff] %v1515
        %1532 = vst [vmem:[%s243 + $0x50] sm:$0xff] %v1516
        %1533 = vst [vmem:[%s243 + $0x58] sm:$0xff] %v1517
        %1534 = vst [vmem:[%s243 + $0x60] sm:$0xff] %v1518
        %1535 = vst [vmem:[%s243 + $0x68] sm:$0xff] %v1519
        %1536 = vst [vmem:[%s243 + $0x70] sm:$0xff] %v1520
        %1537 = vst [vmem:[%s243 + $0x78] sm:$0xff] %v1521
        %s1538 = sand.u32 %s157, 1
        %s1539 = scalar_lea.sflag [#allocation3], %s1538
        %s1540 = sand.u32 %s157, 1
        %s1541 = smul.addr %s1540, 128
        %s1542 = scalar_lea.vmem [#allocation2], %s1541
        // Predicated region
        $region41: #{tpu_custom_call.1} parent=39 // pred_check
          %p1543 = pneg %p167
        $region42: #{tpu_custom_call.1} parent=39 // pred_check_branch
          %1545 = sbr.rel (%p1543) target = $region44
        $region43: #{tpu_custom_call.1} parent=39 // pred_region
          %s1546 = smul.u32 %s23, 2
          %s1547 = sadd.s32 %s1546, %s24
          %s1549 = ssub.s32 2048, 2048
          %1550 = vsyncadd %s1539, %s1549
          %s1551 = smul.addr %s1547, 16
          %s1552 = smul.addr %s1551, 128
          %s1553 = scalar_lea.hbm %s5, %s1552
          %s1554 = sshll.u32 %s1542, 4
          %s1555 = int_to_ptr.vmem [resolvable:$true] %s1554
          %1560 = dma.vmem_to_hbm [thread:$0]  %s1555, 2048, %s1553, %s1539, 128, 128, 8
        $region44: #{tpu_custom_call.1} parent=39 // pred_fallthru
          _
      $region40: #{tpu_custom_call.1} parent=5 // pred_fallthru
        _
      %p1561 = scmp.le.s32.totalorder 2, %s14
      // Predicated region
      $region45: #{tpu_custom_call.1} parent=5 // pred_check
        %p1562 = pneg %p1561
      $region46: #{tpu_custom_call.1} parent=5 // pred_check_branch
        %1564 = sbr.rel (%p1562) target = $region48
      $region47: #{tpu_custom_call.1} parent=5 // pred_region
        %s1565 = ssub.s32 %s14, 2
        // Predicated region
        $region49: #{tpu_custom_call.1} parent=47 // pred_check
          %p1566 = pneg %p173
        $region50: #{tpu_custom_call.1} parent=47 // pred_check_branch
          %1568 = sbr.rel (%p1566) target = $region52
        $region51: #{tpu_custom_call.1} parent=47 // pred_region
          %s1569 = sand.u32 %s158, 1
          %s1570 = scalar_lea.sflag [#allocation3], %s1569
          %s1571 = sand.u32 %s158, 1
          %s1572 = smul.addr %s1571, 128
          %s1573 = scalar_lea.vmem [#allocation2], %s1572
          %1574 = dma.done %s1570, 2048
        $region52: #{tpu_custom_call.1} parent=47 // pred_fallthru
          _
      $region48: #{tpu_custom_call.1} parent=5 // pred_fallthru
        _
    $region6: #{tpu_custom_call.1} parent=1 // loop_footer
      %s18 = sadd.s32 1, %s14
    $region7: #{tpu_custom_call.1} parent=1 // loop_footer_branch
      %13 = sbr.rel target = $region3
    $region8: #{tpu_custom_call.1} parent=1 // loop_exit
      _
    %1575 = vsyncpa [#allocation3], 1
    %s1576 = scalar_lea.sflag [#allocation3], 1
    %1577 = vsyncpa %s1576, 1

</llo_original>
